<compile_context>
chip_gen: v7x
topology: tpu7x:2x2x1
jax: 0.10.0
libtpu: 0.0.40
codegen_flags: <defaults>
</compile_context>

<pallas_src>
import functools

import numpy as np
import jax
import jax.numpy as jnp
from jax import lax
from jax.experimental import pallas as pl
from jax.experimental.pallas import tpu as pltpu


# ----------------------------------------------------------------------------
# Fused encoder kernel: one grid step == TB batch elements.
# ----------------------------------------------------------------------------
def _encoder_kernel(x_ref, w0_ref, b0_ref, w1_ref, b1_ref, w2_ref, b2_ref,
                    wfc_ref, bfc_ref, out_ref,
                    xp0_ref, xp1_ref, xp2_ref, y2_ref, rows_ref,
                    *, geom, tb, mxu_dtype):
    (H, W, Cin, Ho0, Wo0, C1, Ho1, Wo1, C2, Ho2, Wo2, C3, Lpad) = geom
    f32 = jnp.float32

    def gather_rows(src_ref, hp, dh, so, k_in):
        # Stride-2 row slices for tap `dh` of all TB batch elements, stacked
        # along M in (b, so) order.  src_ref is 2-D: (tb*hp, k_in).
        if tb == 1:
            return src_ref[pl.ds(dh, so, stride=2), :]
        for b in range(tb):
            rows_ref[b * so:(b + 1) * so, :k_in] = \
                src_ref[pl.ds(b * hp + dh, so, stride=2), :]
        return rows_ref[:tb * so, :k_in]

    def conv(src_ref, hp, w_ref, b_ref, so, k_in, n_out):
        # 3x3 / stride-2 / pad-1 conv + bias + ReLU as 3 accumulated MXU
        # matmuls; width padding is folded into the pre-expanded weights.
        acc = jnp.broadcast_to(b_ref[...], (tb * so, n_out))
        for dh in range(3):
            rows = gather_rows(src_ref, hp, dh, so, k_in)
            acc = acc + jnp.dot(rows.astype(mxu_dtype), w_ref[dh],
                                preferred_element_type=f32)
        return jnp.maximum(acc, 0.0)

    def stage(dst_ref, y, ho, n_out):
        # Stage a conv output into the next layer's height-padded scratch:
        # zero only the two halo rows per element, interior fully overwritten.
        zrow = jnp.zeros((1, n_out), f32)
        for b in range(tb):
            base = b * (ho + 2)
            dst_ref[base:base + 1, :] = zrow
            dst_ref[base + ho + 1:base + ho + 2, :] = zrow
            dst_ref[base + 1:base + ho + 1, :] = y[b * ho:(b + 1) * ho, :]

    # Copy the (already height-padded) input block into a 2-D scratch so the
    # stride-2 tap reads stay plain 2-D strided slices.
    for b in range(tb):
        xp0_ref[b * (H + 2):(b + 1) * (H + 2), :] = x_ref[b]

    y0 = conv(xp0_ref, H + 2, w0_ref, b0_ref, Ho0, W * Cin, Wo0 * C1)
    stage(xp1_ref, y0, Ho0, Wo0 * C1)
    y1 = conv(xp1_ref, Ho0 + 2, w1_ref, b1_ref, Ho1, Wo0 * C1, Wo1 * C2)
    stage(xp2_ref, y1, Ho1, Wo1 * C2)
    y2 = conv(xp2_ref, Ho1 + 2, w2_ref, b2_ref, Ho2, Wo1 * C2, Wo2 * C3)
    y2_ref[...] = y2

    # Fused fc_mu / fc_logvar head (weights pre-permuted, concatenated and
    # zero-padded to 128 lanes); accumulator starts at the bias.
    fc = jnp.broadcast_to(bfc_ref[...], (tb, Lpad))
    for h in range(Ho2):
        rows = y2_ref[pl.ds(h, tb, stride=Ho2), :]      # batch-major (tb, 128)
        fc = fc + jnp.dot(rows.astype(mxu_dtype), wfc_ref[h],
                          preferred_element_type=f32)
    for b in range(tb):
        out_ref[b] = fc[b:b + 1, :]


# ----------------------------------------------------------------------------
# One-time host-side parameter preprocessing (numpy).
# ----------------------------------------------------------------------------
def _build_conv_weight(w_oihw, Wo, Wi):
    """(3, Wi*Cin, Wo*Cout): fold the (dw, cin) im2col gather and the width
    padding of a 3x3/stride-2/pad-1 conv into a block-sparse matmul operand
    whose output columns are (wo, cout)."""
    w = np.asarray(w_oihw, np.float32)
    Co, Ci, kh, kw = w.shape
    blk = np.zeros((kh, Wi * Ci, Wo * Co), np.float32)
    for dh in range(kh):
        for wo in range(Wo):
            for dw in range(kw):
                wi = 2 * wo + dw - 1          # width padding folded here
                if 0 <= wi < Wi:
                    blk[dh, wi * Ci:(wi + 1) * Ci, wo * Co:(wo + 1) * Co] = \
                        w[:, :, dh, dw].T
    return blk


def _tile_bias(b, Wo):
    return np.tile(np.asarray(b, np.float32), Wo)[None, :]


def _build_fc_weight(w_mu, w_lv, Ho2, Wo2, C3, lpad):
    """(Ho2, Wo2*C3, lpad): concatenate the two heads, permute rows so the
    kernel's (h, w*C3+c) activation layout matches PyTorch's NCHW flatten
    (c*H*W + h*W + w), and zero-pad the output columns to `lpad` lanes."""
    wcat = np.concatenate([np.asarray(w_mu, np.float32),
                           np.asarray(w_lv, np.float32)], axis=0)
    l2 = wcat.shape[0]
    wk = (wcat.reshape(l2, C3, Ho2, Wo2)
              .transpose(2, 3, 1, 0)
              .reshape(Ho2, Wo2 * C3, l2))
    out = np.zeros((Ho2, Wo2 * C3, lpad), np.float32)
    out[:, :, :l2] = wk
    return out


def prepare_params(params, height, width, latent_size, mxu_dtype=jnp.float32):
    """One-time weight re-layout.  mxu_dtype=jnp.bfloat16 halves weight VMEM
    and uses the bf16 MXU path on v6e/v7x (f32 accumulation in-kernel)."""
    assert height % 8 == 0 and width % 8 == 0
    Wo0, Wo1, Wo2 = width // 2, width // 4, width // 8
    Ho2 = height // 8
    lpad = max(128, ((2 * latent_size + 127) // 128) * 128)
    bfc = np.zeros((1, lpad), np.float32)
    bfc[0, :2 * latent_size] = np.concatenate(
        [np.asarray(params["b_mu"], np.float32),
         np.asarray(params["b_lv"], np.float32)])
    return {
        "w0": jnp.asarray(_build_conv_weight(params["w0"], Wo0, width), mxu_dtype),
        "b0": jnp.asarray(_tile_bias(params["b0"], Wo0)),
        "w1": jnp.asarray(_build_conv_weight(params["w1"], Wo1, Wo0), mxu_dtype),
        "b1": jnp.asarray(_tile_bias(params["b1"], Wo1)),
        "w2": jnp.asarray(_build_conv_weight(params["w2"], Wo2, Wo1), mxu_dtype),
        "b2": jnp.asarray(_tile_bias(params["b2"], Wo2)),
        "wfc": jnp.asarray(_build_fc_weight(params["w_mu"], params["w_lv"],
                                            Ho2, Wo2, 64, lpad), mxu_dtype),
        "bfc": jnp.asarray(bfc),
    }


# ----------------------------------------------------------------------------
# Forward pass
# ----------------------------------------------------------------------------
def _pick_tb(batch):
    """Largest batch tile <= 8 that divides `batch` while keeping >= 2 grid
    steps (keeps both v7x TensorCores busy; free on v5e/v6e)."""
    tb = 1
    for cand in range(1, min(batch, 8) + 1):
        if batch % cand == 0 and batch // cand >= 2:
            tb = cand
    return tb


def vencoder_forward(prep, x_nchw, *, latent, tb=None):
    B, Cin, H, W = x_nchw.shape
    assert H % 8 == 0 and W % 8 == 0
    Ho0, Wo0 = H // 2, W // 2
    Ho1, Wo1 = H // 4, W // 4
    Ho2, Wo2 = H // 8, W // 8
    C1, C2, C3 = 16, 32, 64
    Lpad = prep["bfc"].shape[1]
    if tb is None:
        tb = _pick_tb(B)
    assert B % tb == 0

    # Tiny layout plumbing (one fused XLA op on a few KB): NCHW -> NHWC,
    # zero-pad the height only (width padding is folded into the weights),
    # flatten (W, Cin) into the lane dimension.
    xp = jnp.transpose(x_nchw, (0, 2, 3, 1)).astype(jnp.float32)
    xp = jnp.pad(xp, ((0, 0), (1, 1), (0, 0), (0, 0)))
    xp = xp.reshape(B, H + 2, W * Cin)

    geom = (H, W, Cin, Ho0, Wo0, C1, Ho1, Wo1, C2, Ho2, Wo2, C3, Lpad)
    kernel = functools.partial(_encoder_kernel, geom=geom, tb=tb,
                               mxu_dtype=prep["w0"].dtype)

    out = pl.pallas_call(
        kernel,
        out_shape=jax.ShapeDtypeStruct((B, 1, Lpad), jnp.float32),
        grid=(B // tb,),
        in_specs=[
            pl.BlockSpec((tb, H + 2, W * Cin), lambda i: (i, 0, 0)),
            pl.BlockSpec((3, W * Cin, Wo0 * C1), lambda i: (0, 0, 0)),
            pl.BlockSpec((1, Wo0 * C1), lambda i: (0, 0)),
            pl.BlockSpec((3, Wo0 * C1, Wo1 * C2), lambda i: (0, 0, 0)),
            pl.BlockSpec((1, Wo1 * C2), lambda i: (0, 0)),
            pl.BlockSpec((3, Wo1 * C2, Wo2 * C3), lambda i: (0, 0, 0)),
            pl.BlockSpec((1, Wo2 * C3), lambda i: (0, 0)),
            pl.BlockSpec((Ho2, Wo2 * C3, Lpad), lambda i: (0, 0, 0)),
            pl.BlockSpec((1, Lpad), lambda i: (0, 0)),
        ],
        out_specs=pl.BlockSpec((tb, 1, Lpad), lambda i: (i, 0, 0)),
        scratch_shapes=[
            pltpu.VMEM((tb * (H + 2), W * Cin), jnp.float32),     # padded input
            pltpu.VMEM((tb * (Ho0 + 2), Wo0 * C1), jnp.float32),  # padded act1
            pltpu.VMEM((tb * (Ho1 + 2), Wo1 * C2), jnp.float32),  # padded act2
            pltpu.VMEM((tb * Ho2, Wo2 * C3), jnp.float32),        # act3 (fc in)
            pltpu.VMEM((tb * Ho0, max(W * Cin, Wo0 * C1, Wo1 * C2)),
                       jnp.float32),                              # stacked rows
        ],
        compiler_params=pltpu.CompilerParams(
            dimension_semantics=("parallel",),
            vmem_limit_bytes=32 * 1024 * 1024),
    )(xp, prep["w0"], prep["b0"], prep["w1"], prep["b1"],
      prep["w2"], prep["b2"], prep["wfc"], prep["bfc"])

    out = out.reshape(B, Lpad)
    return out[:, :latent], out[:, latent:2 * latent]


# ----------------------------------------------------------------------------
# Pure-JAX reference (lax.conv, highest precision) for correctness checking
# ----------------------------------------------------------------------------
def vencoder_reference(params, x_nchw):
    prec = lax.Precision.HIGHEST

    def conv(x, w, b):
        y = lax.conv_general_dilated(
            x, w, window_strides=(2, 2), padding=((1, 1), (1, 1)),
            dimension_numbers=("NCHW", "OIHW", "NCHW"), precision=prec)
        return jax.nn.relu(y + b[None, :, None, None])

    x = conv(x_nchw, params["w0"], params["b0"])
    x = conv(x, params["w1"], params["b1"])
    x = conv(x, params["w2"], params["b2"])
    flat = x.reshape(x.shape[0], -1)
    mu = jnp.dot(flat, params["w_mu"].T, precision=prec) + params["b_mu"]
    logvar = jnp.dot(flat, params["w_lv"].T, precision=prec) + params["b_lv"]
    return mu, logvar


def init_params(key, n_features, height, width, latent_size):
    ks = jax.random.split(key, 10)
    fc_in = 64 * (height // 8) * (width // 8)
    return {
        "w0": 0.1 * jax.random.normal(ks[0], (16, n_features, 3, 3), jnp.float32),
        "b0": 0.1 * jax.random.normal(ks[1], (16,), jnp.float32),
        "w1": 0.1 * jax.random.normal(ks[2], (32, 16, 3, 3), jnp.float32),
        "b1": 0.1 * jax.random.normal(ks[3], (32,), jnp.float32),
        "w2": 0.1 * jax.random.normal(ks[4], (64, 32, 3, 3), jnp.float32),
        "b2": 0.1 * jax.random.normal(ks[5], (64,), jnp.float32),
        "w_mu": 0.05 * jax.random.normal(ks[6], (latent_size, fc_in), jnp.float32),
        "b_mu": 0.05 * jax.random.normal(ks[7], (latent_size,), jnp.float32),
        "w_lv": 0.05 * jax.random.normal(ks[8], (latent_size, fc_in), jnp.float32),
        "b_lv": 0.05 * jax.random.normal(ks[9], (latent_size,), jnp.float32),
    }


if __name__ == "__main__":
    B, C, H, W = 2, 4, 16, 16
    latent = 8

    key = jax.random.PRNGKey(0)
    k_x, k_p = jax.random.split(key)
    x = jax.random.normal(k_x, (B, C, H, W), jnp.float32)
    params = init_params(k_p, C, H, W, latent)

    prep = prepare_params(params, H, W, latent)      # one-time weight re-layout
    fwd = jax.jit(functools.partial(vencoder_forward, latent=latent))

    # Small batch: TB=1, grid=(2,) (one batch element per core).
    mu, logvar = fwd(prep, x)
    jax.block_until_ready((mu, logvar))
    mu_ref, lv_ref = vencoder_reference(params, x)
    assert mu.shape == (B, latent) and logvar.shape == (B, latent)
    assert jnp.allclose(mu, mu_ref, atol=1e-3, rtol=1e-3)
    assert jnp.allclose(logvar, lv_ref, atol=1e-3, rtol=1e-3)

    # Larger batch: exercises the batch-tiled path (TB=4, grid=(2,)).
    x8 = jax.random.normal(jax.random.PRNGKey(1), (8, C, H, W), jnp.float32)
    mu8, lv8 = fwd(prep, x8)
    jax.block_until_ready((mu8, lv8))
    mu8_ref, lv8_ref = vencoder_reference(params, x8)
    assert mu8.shape == (8, latent) and lv8.shape == (8, latent)
    assert jnp.allclose(mu8, mu8_ref, atol=1e-3, rtol=1e-3)
    assert jnp.allclose(lv8, lv8_ref, atol=1e-3, rtol=1e-3)

    print("KERNEL_OK")
</pallas_src>

<mosaic_0001>
module attributes {stable_mosaic.version = 11 : i64} {
  func.func @_encoder_kernel(%arg0: i32, %arg1: memref<1x18x64xf32, #tpu.memory_space<vmem>>, %arg2: memref<3x64x128xf32, #tpu.memory_space<vmem>>, %arg3: memref<1x128xf32, #tpu.memory_space<vmem>>, %arg4: memref<3x128x128xf32, #tpu.memory_space<vmem>>, %arg5: memref<1x128xf32, #tpu.memory_space<vmem>>, %arg6: memref<3x128x128xf32, #tpu.memory_space<vmem>>, %arg7: memref<1x128xf32, #tpu.memory_space<vmem>>, %arg8: memref<2x128x128xf32, #tpu.memory_space<vmem>>, %arg9: memref<1x128xf32, #tpu.memory_space<vmem>>, %arg10: memref<1x1x128xf32, #tpu.memory_space<vmem>>, %arg11: memref<18x64xf32, #tpu.memory_space<vmem>>, %arg12: memref<10x128xf32, #tpu.memory_space<vmem>>, %arg13: memref<6x128xf32, #tpu.memory_space<vmem>>, %arg14: memref<2x128xf32, #tpu.memory_space<vmem>>, %arg15: memref<8x128xf32, #tpu.memory_space<vmem>>) attributes {dimension_semantics = [#tpu.dimension_semantics<parallel>], iteration_bounds = array<i64: 2>, scalar_prefetch = 0 : i64, scratch_operands = 5 : i64, tpu.core_type = #tpu.core_type<tc>, window_params = [{transform_indices = @transform_0, window_bounds = array<i64: 1, 18, 64>}, {pipeline_mode = #tpu.pipeline_mode<synchronous>, transform_indices = @transform_1, window_bounds = array<i64: 3, 64, 128>}, {pipeline_mode = #tpu.pipeline_mode<synchronous>, transform_indices = @transform_2, window_bounds = array<i64: 1, 128>}, {pipeline_mode = #tpu.pipeline_mode<synchronous>, transform_indices = @transform_3, window_bounds = array<i64: 3, 128, 128>}, {pipeline_mode = #tpu.pipeline_mode<synchronous>, transform_indices = @transform_4, window_bounds = array<i64: 1, 128>}, {pipeline_mode = #tpu.pipeline_mode<synchronous>, transform_indices = @transform_5, window_bounds = array<i64: 3, 128, 128>}, {pipeline_mode = #tpu.pipeline_mode<synchronous>, transform_indices = @transform_6, window_bounds = array<i64: 1, 128>}, {pipeline_mode = #tpu.pipeline_mode<synchronous>, transform_indices = @transform_7, window_bounds = array<i64: 2, 128, 128>}, {pipeline_mode = #tpu.pipeline_mode<synchronous>, transform_indices = @transform_8, window_bounds = array<i64: 1, 128>}, {transform_indices = @transform_9, window_bounds = array<i64: 1, 1, 128>}]} {
    %c0 = arith.constant 0 : index
    %c0_0 = arith.constant 0 : index
    %c0_1 = arith.constant 0 : index
    %0 = vector.load %arg1[%c0, %c0_0, %c0_1] : memref<1x18x64xf32, #tpu.memory_space<vmem>>, vector<1x18x64xf32>
    %1 = vector.shape_cast %0 : vector<1x18x64xf32> to vector<18x64xf32>
    %c0_2 = arith.constant 0 : index
    %c0_3 = arith.constant 0 : index
    %2 = vector.load %arg11[%c0_2, %c0_3] : memref<18x64xf32, #tpu.memory_space<vmem>>, vector<18x64xf32>
    tpu.vector_store %arg11[%c0_2, %c0_3], %1 {strides = array<i32>} : memref<18x64xf32, #tpu.memory_space<vmem>>, vector<18x64xf32>,
    %c0_4 = arith.constant 0 : index
    %c0_5 = arith.constant 0 : index
    %3 = vector.load %arg3[%c0_4, %c0_5] : memref<1x128xf32, #tpu.memory_space<vmem>>, vector<1x128xf32>
    %4 = vector.shape_cast %3 : vector<1x128xf32> to vector<1x128xf32>
    %5 = vector.broadcast %4 : vector<1x128xf32> to vector<8x128xf32>
    %c0_6 = arith.constant 0 : index
    %c0_7 = arith.constant 0 : index
    %6 = tpu.strided_load %arg11[%c0_6, %c0_7] {strides = array<i32: 2, 1>} : memref<18x64xf32, #tpu.memory_space<vmem>>, vector<8x64xf32>
    %c0_8 = arith.constant 0 : index
    %c0_9 = arith.constant 0 : index
    %c0_10 = arith.constant 0 : index
    %7 = vector.load %arg2[%c0_8, %c0_9, %c0_10] : memref<3x64x128xf32, #tpu.memory_space<vmem>>, vector<1x64x128xf32>
    %8 = vector.shape_cast %7 : vector<1x64x128xf32> to vector<64x128xf32>
    %cst = arith.constant dense<0.000000e+00> : vector<8x128xf32>
    %9 = tpu.matmul %6, %8, %cst {dimension_numbers = #tpu.dot_dimension_numbers<[1], [0], [0], [1], [0, 0, 1, 1], [], []>} : vector<8x64xf32>, vector<64x128xf32>, vector<8x128xf32> -> vector<8x128xf32>
    %10 = arith.addf %5, %9 : vector<8x128xf32>
    %c1 = arith.constant 1 : index
    %c0_11 = arith.constant 0 : index
    %11 = tpu.strided_load %arg11[%c1, %c0_11] {strides = array<i32: 2, 1>} : memref<18x64xf32, #tpu.memory_space<vmem>>, vector<8x64xf32>
    %c1_12 = arith.constant 1 : index
    %c0_13 = arith.constant 0 : index
    %c0_14 = arith.constant 0 : index
    %12 = vector.load %arg2[%c1_12, %c0_13, %c0_14] : memref<3x64x128xf32, #tpu.memory_space<vmem>>, vector<1x64x128xf32>
    %13 = vector.shape_cast %12 : vector<1x64x128xf32> to vector<64x128xf32>
    %cst_15 = arith.constant dense<0.000000e+00> : vector<8x128xf32>
    %14 = tpu.matmul %11, %13, %cst_15 {dimension_numbers = #tpu.dot_dimension_numbers<[1], [0], [0], [1], [0, 0, 1, 1], [], []>} : vector<8x64xf32>, vector<64x128xf32>, vector<8x128xf32> -> vector<8x128xf32>
    %15 = arith.addf %10, %14 : vector<8x128xf32>
    %c2 = arith.constant 2 : index
    %c0_16 = arith.constant 0 : index
    %16 = tpu.strided_load %arg11[%c2, %c0_16] {strides = array<i32: 2, 1>} : memref<18x64xf32, #tpu.memory_space<vmem>>, vector<8x64xf32>
    %c2_17 = arith.constant 2 : index
    %c0_18 = arith.constant 0 : index
    %c0_19 = arith.constant 0 : index
    %17 = vector.load %arg2[%c2_17, %c0_18, %c0_19] : memref<3x64x128xf32, #tpu.memory_space<vmem>>, vector<1x64x128xf32>
    %18 = vector.shape_cast %17 : vector<1x64x128xf32> to vector<64x128xf32>
    %cst_20 = arith.constant dense<0.000000e+00> : vector<8x128xf32>
    %19 = tpu.matmul %16, %18, %cst_20 {dimension_numbers = #tpu.dot_dimension_numbers<[1], [0], [0], [1], [0, 0, 1, 1], [], []>} : vector<8x64xf32>, vector<64x128xf32>, vector<8x128xf32> -> vector<8x128xf32>
    %20 = arith.addf %15, %19 : vector<8x128xf32>
    %cst_21 = arith.constant 0.000000e+00 : f32
    %21 = vector.broadcast %cst_21 : f32 to vector<8x128xf32>
    %22 = arith.maximumf %20, %21 : vector<8x128xf32>
    %cst_22 = arith.constant 0.000000e+00 : f32
    %23 = vector.broadcast %cst_22 : f32 to vector<1x128xf32>
    %c0_23 = arith.constant 0 : index
    %c0_24 = arith.constant 0 : index
    %24 = vector.load %arg12[%c0_23, %c0_24] : memref<10x128xf32, #tpu.memory_space<vmem>>, vector<1x128xf32>
    tpu.vector_store %arg12[%c0_23, %c0_24], %23 {strides = array<i32>} : memref<10x128xf32, #tpu.memory_space<vmem>>, vector<1x128xf32>,
    %c9 = arith.constant 9 : index
    %c0_25 = arith.constant 0 : index
    %25 = vector.load %arg12[%c9, %c0_25] : memref<10x128xf32, #tpu.memory_space<vmem>>, vector<1x128xf32>
    tpu.vector_store %arg12[%c9, %c0_25], %23 {strides = array<i32>} : memref<10x128xf32, #tpu.memory_space<vmem>>, vector<1x128xf32>,
    %c1_26 = arith.constant 1 : index
    %c0_27 = arith.constant 0 : index
    %26 = vector.load %arg12[%c1_26, %c0_27] : memref<10x128xf32, #tpu.memory_space<vmem>>, vector<8x128xf32>
    tpu.vector_store %arg12[%c1_26, %c0_27], %22 {strides = array<i32>} : memref<10x128xf32, #tpu.memory_space<vmem>>, vector<8x128xf32>,
    %c0_28 = arith.constant 0 : index
    %c0_29 = arith.constant 0 : index
    %27 = vector.load %arg5[%c0_28, %c0_29] : memref<1x128xf32, #tpu.memory_space<vmem>>, vector<1x128xf32>
    %28 = vector.shape_cast %27 : vector<1x128xf32> to vector<1x128xf32>
    %29 = vector.broadcast %28 : vector<1x128xf32> to vector<4x128xf32>
    %c0_30 = arith.constant 0 : index
    %c0_31 = arith.constant 0 : index
    %30 = tpu.strided_load %arg12[%c0_30, %c0_31] {strides = array<i32: 2, 1>} : memref<10x128xf32, #tpu.memory_space<vmem>>, vector<4x128xf32>
    %c0_32 = arith.constant 0 : index
    %c0_33 = arith.constant 0 : index
    %c0_34 = arith.constant 0 : index
    %31 = vector.load %arg4[%c0_32, %c0_33, %c0_34] : memref<3x128x128xf32, #tpu.memory_space<vmem>>, vector<1x128x128xf32>
    %32 = vector.shape_cast %31 : vector<1x128x128xf32> to vector<128x128xf32>
    %cst_35 = arith.constant dense<0.000000e+00> : vector<4x128xf32>
    %33 = tpu.matmul %30, %32, %cst_35 {dimension_numbers = #tpu.dot_dimension_numbers<[1], [0], [0], [1], [0, 0, 1, 1], [], []>} : vector<4x128xf32>, vector<128x128xf32>, vector<4x128xf32> -> vector<4x128xf32>
    %34 = arith.addf %29, %33 : vector<4x128xf32>
    %c1_36 = arith.constant 1 : index
    %c0_37 = arith.constant 0 : index
    %35 = tpu.strided_load %arg12[%c1_36, %c0_37] {strides = array<i32: 2, 1>} : memref<10x128xf32, #tpu.memory_space<vmem>>, vector<4x128xf32>
    %c1_38 = arith.constant 1 : index
    %c0_39 = arith.constant 0 : index
    %c0_40 = arith.constant 0 : index
    %36 = vector.load %arg4[%c1_38, %c0_39, %c0_40] : memref<3x128x128xf32, #tpu.memory_space<vmem>>, vector<1x128x128xf32>
    %37 = vector.shape_cast %36 : vector<1x128x128xf32> to vector<128x128xf32>
    %cst_41 = arith.constant dense<0.000000e+00> : vector<4x128xf32>
    %38 = tpu.matmul %35, %37, %cst_41 {dimension_numbers = #tpu.dot_dimension_numbers<[1], [0], [0], [1], [0, 0, 1, 1], [], []>} : vector<4x128xf32>, vector<128x128xf32>, vector<4x128xf32> -> vector<4x128xf32>
    %39 = arith.addf %34, %38 : vector<4x128xf32>
    %c2_42 = arith.constant 2 : index
    %c0_43 = arith.constant 0 : index
    %40 = tpu.strided_load %arg12[%c2_42, %c0_43] {strides = array<i32: 2, 1>} : memref<10x128xf32, #tpu.memory_space<vmem>>, vector<4x128xf32>
    %c2_44 = arith.constant 2 : index
    %c0_45 = arith.constant 0 : index
    %c0_46 = arith.constant 0 : index
    %41 = vector.load %arg4[%c2_44, %c0_45, %c0_46] : memref<3x128x128xf32, #tpu.memory_space<vmem>>, vector<1x128x128xf32>
    %42 = vector.shape_cast %41 : vector<1x128x128xf32> to vector<128x128xf32>
    %cst_47 = arith.constant dense<0.000000e+00> : vector<4x128xf32>
    %43 = tpu.matmul %40, %42, %cst_47 {dimension_numbers = #tpu.dot_dimension_numbers<[1], [0], [0], [1], [0, 0, 1, 1], [], []>} : vector<4x128xf32>, vector<128x128xf32>, vector<4x128xf32> -> vector<4x128xf32>
    %44 = arith.addf %39, %43 : vector<4x128xf32>
    %cst_48 = arith.constant 0.000000e+00 : f32
    %45 = vector.broadcast %cst_48 : f32 to vector<4x128xf32>
    %46 = arith.maximumf %44, %45 : vector<4x128xf32>
    %cst_49 = arith.constant 0.000000e+00 : f32
    %47 = vector.broadcast %cst_49 : f32 to vector<1x128xf32>
    %c0_50 = arith.constant 0 : index
    %c0_51 = arith.constant 0 : index
    %48 = vector.load %arg13[%c0_50, %c0_51] : memref<6x128xf32, #tpu.memory_space<vmem>>, vector<1x128xf32>
    tpu.vector_store %arg13[%c0_50, %c0_51], %47 {strides = array<i32>} : memref<6x128xf32, #tpu.memory_space<vmem>>, vector<1x128xf32>,
    %c5 = arith.constant 5 : index
    %c0_52 = arith.constant 0 : index
    %49 = vector.load %arg13[%c5, %c0_52] : memref<6x128xf32, #tpu.memory_space<vmem>>, vector<1x128xf32>
    tpu.vector_store %arg13[%c5, %c0_52], %47 {strides = array<i32>} : memref<6x128xf32, #tpu.memory_space<vmem>>, vector<1x128xf32>,
    %c1_53 = arith.constant 1 : index
    %c0_54 = arith.constant 0 : index
    %50 = vector.load %arg13[%c1_53, %c0_54] : memref<6x128xf32, #tpu.memory_space<vmem>>, vector<4x128xf32>
    tpu.vector_store %arg13[%c1_53, %c0_54], %46 {strides = array<i32>} : memref<6x128xf32, #tpu.memory_space<vmem>>, vector<4x128xf32>,
    %c0_55 = arith.constant 0 : index
    %c0_56 = arith.constant 0 : index
    %51 = vector.load %arg7[%c0_55, %c0_56] : memref<1x128xf32, #tpu.memory_space<vmem>>, vector<1x128xf32>
    %52 = vector.shape_cast %51 : vector<1x128xf32> to vector<1x128xf32>
    %53 = vector.broadcast %52 : vector<1x128xf32> to vector<2x128xf32>
    %c0_57 = arith.constant 0 : index
    %c0_58 = arith.constant 0 : index
    %54 = tpu.strided_load %arg13[%c0_57, %c0_58] {strides = array<i32: 2, 1>} : memref<6x128xf32, #tpu.memory_space<vmem>>, vector<2x128xf32>
    %c0_59 = arith.constant 0 : index
    %c0_60 = arith.constant 0 : index
    %c0_61 = arith.constant 0 : index
    %55 = vector.load %arg6[%c0_59, %c0_60, %c0_61] : memref<3x128x128xf32, #tpu.memory_space<vmem>>, vector<1x128x128xf32>
    %56 = vector.shape_cast %55 : vector<1x128x128xf32> to vector<128x128xf32>
    %cst_62 = arith.constant dense<0.000000e+00> : vector<2x128xf32>
    %57 = tpu.matmul %54, %56, %cst_62 {dimension_numbers = #tpu.dot_dimension_numbers<[1], [0], [0], [1], [0, 0, 1, 1], [], []>} : vector<2x128xf32>, vector<128x128xf32>, vector<2x128xf32> -> vector<2x128xf32>
    %58 = arith.addf %53, %57 : vector<2x128xf32>
    %c1_63 = arith.constant 1 : index
    %c0_64 = arith.constant 0 : index
    %59 = tpu.strided_load %arg13[%c1_63, %c0_64] {strides = array<i32: 2, 1>} : memref<6x128xf32, #tpu.memory_space<vmem>>, vector<2x128xf32>
    %c1_65 = arith.constant 1 : index
    %c0_66 = arith.constant 0 : index
    %c0_67 = arith.constant 0 : index
    %60 = vector.load %arg6[%c1_65, %c0_66, %c0_67] : memref<3x128x128xf32, #tpu.memory_space<vmem>>, vector<1x128x128xf32>
    %61 = vector.shape_cast %60 : vector<1x128x128xf32> to vector<128x128xf32>
    %cst_68 = arith.constant dense<0.000000e+00> : vector<2x128xf32>
    %62 = tpu.matmul %59, %61, %cst_68 {dimension_numbers = #tpu.dot_dimension_numbers<[1], [0], [0], [1], [0, 0, 1, 1], [], []>} : vector<2x128xf32>, vector<128x128xf32>, vector<2x128xf32> -> vector<2x128xf32>
    %63 = arith.addf %58, %62 : vector<2x128xf32>
    %c2_69 = arith.constant 2 : index
    %c0_70 = arith.constant 0 : index
    %64 = tpu.strided_load %arg13[%c2_69, %c0_70] {strides = array<i32: 2, 1>} : memref<6x128xf32, #tpu.memory_space<vmem>>, vector<2x128xf32>
    %c2_71 = arith.constant 2 : index
    %c0_72 = arith.constant 0 : index
    %c0_73 = arith.constant 0 : index
    %65 = vector.load %arg6[%c2_71, %c0_72, %c0_73] : memref<3x128x128xf32, #tpu.memory_space<vmem>>, vector<1x128x128xf32>
    %66 = vector.shape_cast %65 : vector<1x128x128xf32> to vector<128x128xf32>
    %cst_74 = arith.constant dense<0.000000e+00> : vector<2x128xf32>
    %67 = tpu.matmul %64, %66, %cst_74 {dimension_numbers = #tpu.dot_dimension_numbers<[1], [0], [0], [1], [0, 0, 1, 1], [], []>} : vector<2x128xf32>, vector<128x128xf32>, vector<2x128xf32> -> vector<2x128xf32>
    %68 = arith.addf %63, %67 : vector<2x128xf32>
    %cst_75 = arith.constant 0.000000e+00 : f32
    %69 = vector.broadcast %cst_75 : f32 to vector<2x128xf32>
    %70 = arith.maximumf %68, %69 : vector<2x128xf32>
    %c0_76 = arith.constant 0 : index
    %c0_77 = arith.constant 0 : index
    %71 = vector.load %arg14[%c0_76, %c0_77] : memref<2x128xf32, #tpu.memory_space<vmem>>, vector<2x128xf32>
    tpu.vector_store %arg14[%c0_76, %c0_77], %70 {strides = array<i32>} : memref<2x128xf32, #tpu.memory_space<vmem>>, vector<2x128xf32>,
    %c0_78 = arith.constant 0 : index
    %c0_79 = arith.constant 0 : index
    %72 = vector.load %arg9[%c0_78, %c0_79] : memref<1x128xf32, #tpu.memory_space<vmem>>, vector<1x128xf32>
    %c0_80 = arith.constant 0 : index
    %c0_81 = arith.constant 0 : index
    %73 = tpu.strided_load %arg14[%c0_80, %c0_81] {strides = array<i32: 2, 1>} : memref<2x128xf32, #tpu.memory_space<vmem>>, vector<1x128xf32>
    %c0_82 = arith.constant 0 : index
    %c0_83 = arith.constant 0 : index
    %c0_84 = arith.constant 0 : index
    %74 = vector.load %arg8[%c0_82, %c0_83, %c0_84] : memref<2x128x128xf32, #tpu.memory_space<vmem>>, vector<1x128x128xf32>
    %75 = vector.shape_cast %74 : vector<1x128x128xf32> to vector<128x128xf32>
    %cst_85 = arith.constant dense<0.000000e+00> : vector<1x128xf32>
    %76 = tpu.matmul %73, %75, %cst_85 {dimension_numbers = #tpu.dot_dimension_numbers<[1], [0], [0], [1], [0, 0, 1, 1], [], []>} : vector<1x128xf32>, vector<128x128xf32>, vector<1x128xf32> -> vector<1x128xf32>
    %77 = arith.addf %72, %76 : vector<1x128xf32>
    %c1_86 = arith.constant 1 : index
    %c0_87 = arith.constant 0 : index
    %78 = tpu.strided_load %arg14[%c1_86, %c0_87] {strides = array<i32: 2, 1>} : memref<2x128xf32, #tpu.memory_space<vmem>>, vector<1x128xf32>
    %c1_88 = arith.constant 1 : index
    %c0_89 = arith.constant 0 : index
    %c0_90 = arith.constant 0 : index
    %79 = vector.load %arg8[%c1_88, %c0_89, %c0_90] : memref<2x128x128xf32, #tpu.memory_space<vmem>>, vector<1x128x128xf32>
    %80 = vector.shape_cast %79 : vector<1x128x128xf32> to vector<128x128xf32>
    %cst_91 = arith.constant dense<0.000000e+00> : vector<1x128xf32>
    %81 = tpu.matmul %78, %80, %cst_91 {dimension_numbers = #tpu.dot_dimension_numbers<[1], [0], [0], [1], [0, 0, 1, 1], [], []>} : vector<1x128xf32>, vector<128x128xf32>, vector<1x128xf32> -> vector<1x128xf32>
    %82 = arith.addf %77, %81 : vector<1x128xf32>
    %c0_92 = arith.constant 0 : index
    %c0_93 = arith.constant 0 : index
    %c0_94 = arith.constant 0 : index
    %83 = vector.load %arg10[%c0_92, %c0_93, %c0_94] : memref<1x1x128xf32, #tpu.memory_space<vmem>>, vector<1x1x128xf32>
    %84 = vector.shape_cast %83 : vector<1x1x128xf32> to vector<1x128xf32>
    %85 = vector.shape_cast %82 : vector<1x128xf32> to vector<1x1x128xf32>
    tpu.vector_store %arg10[%c0_92, %c0_93, %c0_94], %85 {strides = array<i32>} : memref<1x1x128xf32, #tpu.memory_space<vmem>>, vector<1x1x128xf32>,
    return
  }
  func.func @transform_0(%arg0: i32) -> (i32, i32, i32) {
    %c0_i32 = arith.constant 0 : i32
    %c0_i32_0 = arith.constant 0 : i32
    %c0_i32_1 = arith.constant 0 : i32
    return %arg0, %c0_i32, %c0_i32_0 : i32, i32, i32
  }
  func.func @transform_1(%arg0: i32) -> (i32, i32, i32) {
    %c0_i32 = arith.constant 0 : i32
    %c0_i32_0 = arith.constant 0 : i32
    %c0_i32_1 = arith.constant 0 : i32
    %c0_i32_2 = arith.constant 0 : i32
    return %c0_i32, %c0_i32_0, %c0_i32_1 : i32, i32, i32
  }
  func.func @transform_2(%arg0: i32) -> (i32, i32) {
    %c0_i32 = arith.constant 0 : i32
    %c0_i32_0 = arith.constant 0 : i32
    %c0_i32_1 = arith.constant 0 : i32
    return %c0_i32, %c0_i32_0 : i32, i32
  }
  func.func @transform_3(%arg0: i32) -> (i32, i32, i32) {
    %c0_i32 = arith.constant 0 : i32
    %c0_i32_0 = arith.constant 0 : i32
    %c0_i32_1 = arith.constant 0 : i32
    %c0_i32_2 = arith.constant 0 : i32
    return %c0_i32, %c0_i32_0, %c0_i32_1 : i32, i32, i32
  }
  func.func @transform_4(%arg0: i32) -> (i32, i32) {
    %c0_i32 = arith.constant 0 : i32
    %c0_i32_0 = arith.constant 0 : i32
    %c0_i32_1 = arith.constant 0 : i32
    return %c0_i32, %c0_i32_0 : i32, i32
  }
  func.func @transform_5(%arg0: i32) -> (i32, i32, i32) {
    %c0_i32 = arith.constant 0 : i32
    %c0_i32_0 = arith.constant 0 : i32
    %c0_i32_1 = arith.constant 0 : i32
    %c0_i32_2 = arith.constant 0 : i32
    return %c0_i32, %c0_i32_0, %c0_i32_1 : i32, i32, i32
  }
  func.func @transform_6(%arg0: i32) -> (i32, i32) {
    %c0_i32 = arith.constant 0 : i32
    %c0_i32_0 = arith.constant 0 : i32
    %c0_i32_1 = arith.constant 0 : i32
    return %c0_i32, %c0_i32_0 : i32, i32
  }
  func.func @transform_7(%arg0: i32) -> (i32, i32, i32) {
    %c0_i32 = arith.constant 0 : i32
    %c0_i32_0 = arith.constant 0 : i32
    %c0_i32_1 = arith.constant 0 : i32
    %c0_i32_2 = arith.constant 0 : i32
    return %c0_i32, %c0_i32_0, %c0_i32_1 : i32, i32, i32
  }
  func.func @transform_8(%arg0: i32) -> (i32, i32) {
    %c0_i32 = arith.constant 0 : i32
    %c0_i32_0 = arith.constant 0 : i32
    %c0_i32_1 = arith.constant 0 : i32
    return %c0_i32, %c0_i32_0 : i32, i32
  }
  func.func @transform_9(%arg0: i32) -> (i32, i32, i32) {
    %c0_i32 = arith.constant 0 : i32
    %c0_i32_0 = arith.constant 0 : i32
    %c0_i32_1 = arith.constant 0 : i32
    return %arg0, %c0_i32, %c0_i32_0 : i32, i32, i32
  }
}

</mosaic_0001>

<llo_original>
// kernel: vencoder_forward.1
$region0: #{vencoder_forward.1}
  #allocation0 [shape = 'u32[]', space=smem, size = 0x4, offset = 0x4, fixed_abs, tag = 'smem constant byte address 0x4 - core index']
  #allocation1 [shape = 'u32[144,128]{1,0:T(1,128)}', space=vmem, size = 0x12000, scoped, tag = 'internal scratch']
  #allocation2 [shape = 'f32[18,64]{1,0:T(8,128)}', space=vmem, size = 0x3000, scoped, tag = 'scratch operand']
  #allocation3 [shape = 'f32[10,128]{1,0:T(8,128)}', space=vmem, size = 0x2000, scoped, tag = 'scratch operand']
  #allocation4 [shape = 'f32[6,128]{1,0:T(8,128)}', space=vmem, size = 0x1000, scoped, tag = 'scratch operand']
  #allocation5 [shape = 'f32[2,128]{1,0:T(2,128)}', space=vmem, size = 0x400, scoped, tag = 'scratch operand']
  #allocation6 [shape = 'f32[8,128]{1,0:T(8,128)}', space=vmem, size = 0x1000, scoped, tag = 'scratch operand']
  %s0 = inlined_call_operand.vmem [shape: f32[2,18,64], index: 0, kind: input, shape index: {}]
  %s1 = inlined_call_operand.hbm [shape: f32[3,64,128], index: 1, kind: input, shape index: {}]
  %s2 = inlined_call_operand.vmem [shape: f32[1,128], index: 2, kind: input, shape index: {}]
  %s3 = inlined_call_operand.vmem [shape: f32[3,128,128], index: 3, kind: input, shape index: {}]
  %s4 = inlined_call_operand.vmem [shape: f32[1,128], index: 4, kind: input, shape index: {}]
  %s5 = inlined_call_operand.hbm [shape: f32[3,128,128], index: 5, kind: input, shape index: {}]
  %s6 = inlined_call_operand.vmem [shape: f32[1,128], index: 6, kind: input, shape index: {}]
  %s7 = inlined_call_operand.vmem [shape: f32[2,128,128], index: 7, kind: input, shape index: {}]
  %s8 = inlined_call_operand.vmem [shape: f32[1,128], index: 8, kind: input, shape index: {}]
  %s9 = inlined_call_operand.vmem [shape: f32[2,1,128], index: 9, kind: output, shape index: {}]
  %s10 = sld [smem:[#allocation0]]
  $region77: #{vencoder_forward.1} parent=0
    _
  %s12 = ssub.s32 1, %s10
  %s13 = scalar_select 0, %s12, %s10
  $region1: #{vencoder_forward.1} parent=0
    #allocation7 [shape = 'u8[98304]{0}', space=vmem, size = 0x18000, scoped, tag = 'input window, operand 1, single buffered']
    #allocation8 [shape = 's32[2]{0}', space=sflag, size = 0x8, scoped, tag = 'scoped memory for vencoder_forward.1']
    #allocation9 [shape = 'u8[196608]{0}', space=vmem, size = 0x30000, scoped, tag = 'input window, operand 5, single buffered']
    #allocation10 [shape = 's32[1]{0}', space=sflag, size = 0x4, scoped, tag = 'scoped memory for vencoder_forward.1']
    %14 = vsyncpa [#allocation8], 0
    %15 = vsyncpa [#allocation10], 0
    loop: start=0, step=1, limit=4
    $region2: #{vencoder_forward.1} parent=1 // loop_pre_header
      _
    $region3: #{vencoder_forward.1} parent=1 // loop_header
      %s17 = sphi 0, %s21
      %p18 = scmp.ge.s32.totalorder %s17, 4
      %s27 = sphi 0, %s29
      %s30 = sphi 0, %s27
      %s31 = sphi 0, %s30
      %s47 = sphi 0, %s31
      %s51 = sphi 0, %s51
      %s53 = sphi 0, %s51
      %s54 = sphi 0, %s53
      %s68 = sphi 0, %s54
      %s72 = sphi 0, %s72
      %s74 = sphi 0, %s72
      %s75 = sphi 0, %s74
      %s89 = sphi 0, %s75
      %s93 = sphi 0, %s93
      %s95 = sphi 0, %s93
      %s96 = sphi 0, %s95
      %s110 = sphi 0, %s96
      %s114 = sphi 0, %s114
      %s116 = sphi 0, %s114
      %s117 = sphi 0, %s116
      %s131 = sphi 0, %s117
      %s135 = sphi 0, %s135
      %s137 = sphi 0, %s135
      %s138 = sphi 0, %s137
      %s152 = sphi 0, %s138
      %s156 = sphi 0, %s156
      %s158 = sphi 0, %s156
      %s159 = sphi 0, %s158
      %s173 = sphi 0, %s159
      %s177 = sphi 0, %s177
      %s179 = sphi 0, %s177
      %s180 = sphi 0, %s179
      %s194 = sphi 0, %s180
      %s198 = sphi 0, %s198
      %s200 = sphi 0, %s198
      %s201 = sphi 0, %s200
      %s215 = sphi 0, %s201
      %s221 = sphi 0, %s223
      %s224 = sphi 0, %s221
      %s225 = sphi 0, %s224
      %s241 = sphi 0, %s225
    $region4: #{vencoder_forward.1} parent=1 // loop_header_branch
      %20 = sbr.rel (%p18) target = $region8
    $region5: #{vencoder_forward.1} parent=1 // loop_body
      %s22 = ssub.s32 %s17, 1
      %s23 = ssub.s32 %s17, 2
      %s24 = sadd.s32 %s17, 1
      %s25 = ssub.s32 %s17, %s24
      %p26 = scmp.eq.s32.totalorder %s25, 0
      %s28 = sadd.s32 %s27, 1
      %s29 = scalar_select %p26, %s27, %s28
      %p32 = pneg %p26
      %p33 = scmp.eq.s32.totalorder %s17, 1
      %p34 = por %p32, %p33
      %p35 = scmp.ne.s32.totalorder %s27, %s30
      %p36 = scmp.eq.s32.totalorder %s17, 0
      %p37 = por %p35, %p36
      %p38 = scmp.ne.s32.totalorder %s27, %s30
      %p39 = scmp.eq.s32.totalorder %s22, 1
      %p40 = por %p38, %p39
      %p41 = scmp.ne.s32.totalorder %s30, %s31
      %p42 = scmp.eq.s32.totalorder %s22, 0
      %p43 = por %p41, %p42
      %p44 = scmp.ne.s32.totalorder %s30, %s31
      %p45 = scmp.eq.s32.totalorder %s23, 1
      %p46 = por %p44, %p45
      %p48 = scmp.ne.s32.totalorder %s31, %s47
      %p49 = scmp.eq.s32.totalorder %s23, 0
      %p50 = por %p48, %p49
      %s52 = sadd.s32 %s51, 1
      %p55 = scmp.eq.s32.totalorder %s17, 1
      %p56 = scmp.ne.s32.totalorder %s51, %s53
      %p57 = scmp.eq.s32.totalorder %s17, 0
      %p58 = por %p56, %p57
      %p59 = scmp.ne.s32.totalorder %s51, %s53
      %p60 = scmp.eq.s32.totalorder %s22, 1
      %p61 = por %p59, %p60
      %p62 = scmp.ne.s32.totalorder %s53, %s54
      %p63 = scmp.eq.s32.totalorder %s22, 0
      %p64 = por %p62, %p63
      %p65 = scmp.ne.s32.totalorder %s53, %s54
      %p66 = scmp.eq.s32.totalorder %s23, 1
      %p67 = por %p65, %p66
      %p69 = scmp.ne.s32.totalorder %s54, %s68
      %p70 = scmp.eq.s32.totalorder %s23, 0
      %p71 = por %p69, %p70
      %s73 = sadd.s32 %s72, 1
      %p76 = scmp.eq.s32.totalorder %s17, 1
      %p77 = scmp.ne.s32.totalorder %s72, %s74
      %p78 = scmp.eq.s32.totalorder %s17, 0
      %p79 = por %p77, %p78
      %p80 = scmp.ne.s32.totalorder %s72, %s74
      %p81 = scmp.eq.s32.totalorder %s22, 1
      %p82 = por %p80, %p81
      %p83 = scmp.ne.s32.totalorder %s74, %s75
      %p84 = scmp.eq.s32.totalorder %s22, 0
      %p85 = por %p83, %p84
      %p86 = scmp.ne.s32.totalorder %s74, %s75
      %p87 = scmp.eq.s32.totalorder %s23, 1
      %p88 = por %p86, %p87
      %p90 = scmp.ne.s32.totalorder %s75, %s89
      %p91 = scmp.eq.s32.totalorder %s23, 0
      %p92 = por %p90, %p91
      %s94 = sadd.s32 %s93, 1
      %p97 = scmp.eq.s32.totalorder %s17, 1
      %p98 = scmp.ne.s32.totalorder %s93, %s95
      %p99 = scmp.eq.s32.totalorder %s17, 0
      %p100 = por %p98, %p99
      %p101 = scmp.ne.s32.totalorder %s93, %s95
      %p102 = scmp.eq.s32.totalorder %s22, 1
      %p103 = por %p101, %p102
      %p104 = scmp.ne.s32.totalorder %s95, %s96
      %p105 = scmp.eq.s32.totalorder %s22, 0
      %p106 = por %p104, %p105
      %p107 = scmp.ne.s32.totalorder %s95, %s96
      %p108 = scmp.eq.s32.totalorder %s23, 1
      %p109 = por %p107, %p108
      %p111 = scmp.ne.s32.totalorder %s96, %s110
      %p112 = scmp.eq.s32.totalorder %s23, 0
      %p113 = por %p111, %p112
      %s115 = sadd.s32 %s114, 1
      %p118 = scmp.eq.s32.totalorder %s17, 1
      %p119 = scmp.ne.s32.totalorder %s114, %s116
      %p120 = scmp.eq.s32.totalorder %s17, 0
      %p121 = por %p119, %p120
      %p122 = scmp.ne.s32.totalorder %s114, %s116
      %p123 = scmp.eq.s32.totalorder %s22, 1
      %p124 = por %p122, %p123
      %p125 = scmp.ne.s32.totalorder %s116, %s117
      %p126 = scmp.eq.s32.totalorder %s22, 0
      %p127 = por %p125, %p126
      %p128 = scmp.ne.s32.totalorder %s116, %s117
      %p129 = scmp.eq.s32.totalorder %s23, 1
      %p130 = por %p128, %p129
      %p132 = scmp.ne.s32.totalorder %s117, %s131
      %p133 = scmp.eq.s32.totalorder %s23, 0
      %p134 = por %p132, %p133
      %s136 = sadd.s32 %s135, 1
      %p139 = scmp.eq.s32.totalorder %s17, 1
      %p140 = scmp.ne.s32.totalorder %s135, %s137
      %p141 = scmp.eq.s32.totalorder %s17, 0
      %p142 = por %p140, %p141
      %p143 = scmp.ne.s32.totalorder %s135, %s137
      %p144 = scmp.eq.s32.totalorder %s22, 1
      %p145 = por %p143, %p144
      %p146 = scmp.ne.s32.totalorder %s137, %s138
      %p147 = scmp.eq.s32.totalorder %s22, 0
      %p148 = por %p146, %p147
      %p149 = scmp.ne.s32.totalorder %s137, %s138
      %p150 = scmp.eq.s32.totalorder %s23, 1
      %p151 = por %p149, %p150
      %p153 = scmp.ne.s32.totalorder %s138, %s152
      %p154 = scmp.eq.s32.totalorder %s23, 0
      %p155 = por %p153, %p154
      %s157 = sadd.s32 %s156, 1
      %p160 = scmp.eq.s32.totalorder %s17, 1
      %p161 = scmp.ne.s32.totalorder %s156, %s158
      %p162 = scmp.eq.s32.totalorder %s17, 0
      %p163 = por %p161, %p162
      %p164 = scmp.ne.s32.totalorder %s156, %s158
      %p165 = scmp.eq.s32.totalorder %s22, 1
      %p166 = por %p164, %p165
      %p167 = scmp.ne.s32.totalorder %s158, %s159
      %p168 = scmp.eq.s32.totalorder %s22, 0
      %p169 = por %p167, %p168
      %p170 = scmp.ne.s32.totalorder %s158, %s159
      %p171 = scmp.eq.s32.totalorder %s23, 1
      %p172 = por %p170, %p171
      %p174 = scmp.ne.s32.totalorder %s159, %s173
      %p175 = scmp.eq.s32.totalorder %s23, 0
      %p176 = por %p174, %p175
      %s178 = sadd.s32 %s177, 1
      %p181 = scmp.eq.s32.totalorder %s17, 1
      %p182 = scmp.ne.s32.totalorder %s177, %s179
      %p183 = scmp.eq.s32.totalorder %s17, 0
      %p184 = por %p182, %p183
      %p185 = scmp.ne.s32.totalorder %s177, %s179
      %p186 = scmp.eq.s32.totalorder %s22, 1
      %p187 = por %p185, %p186
      %p188 = scmp.ne.s32.totalorder %s179, %s180
      %p189 = scmp.eq.s32.totalorder %s22, 0
      %p190 = por %p188, %p189
      %p191 = scmp.ne.s32.totalorder %s179, %s180
      %p192 = scmp.eq.s32.totalorder %s23, 1
      %p193 = por %p191, %p192
      %p195 = scmp.ne.s32.totalorder %s180, %s194
      %p196 = scmp.eq.s32.totalorder %s23, 0
      %p197 = por %p195, %p196
      %s199 = sadd.s32 %s198, 1
      %p202 = scmp.eq.s32.totalorder %s17, 1
      %p203 = scmp.ne.s32.totalorder %s198, %s200
      %p204 = scmp.eq.s32.totalorder %s17, 0
      %p205 = por %p203, %p204
      %p206 = scmp.ne.s32.totalorder %s198, %s200
      %p207 = scmp.eq.s32.totalorder %s22, 1
      %p208 = por %p206, %p207
      %p209 = scmp.ne.s32.totalorder %s200, %s201
      %p210 = scmp.eq.s32.totalorder %s22, 0
      %p211 = por %p209, %p210
      %p212 = scmp.ne.s32.totalorder %s200, %s201
      %p213 = scmp.eq.s32.totalorder %s23, 1
      %p214 = por %p212, %p213
      %p216 = scmp.ne.s32.totalorder %s201, %s215
      %p217 = scmp.eq.s32.totalorder %s23, 0
      %p218 = por %p216, %p217
      %s219 = ssub.s32 %s17, %s24
      %p220 = scmp.eq.s32.totalorder %s219, 0
      %s222 = sadd.s32 %s221, 1
      %s223 = scalar_select %p220, %s221, %s222
      %p226 = pneg %p220
      %p227 = scmp.eq.s32.totalorder %s17, 1
      %p228 = por %p226, %p227
      %p229 = scmp.ne.s32.totalorder %s221, %s224
      %p230 = scmp.eq.s32.totalorder %s17, 0
      %p231 = por %p229, %p230
      %p232 = scmp.ne.s32.totalorder %s221, %s224
      %p233 = scmp.eq.s32.totalorder %s22, 1
      %p234 = por %p232, %p233
      %p235 = scmp.ne.s32.totalorder %s224, %s225
      %p236 = scmp.eq.s32.totalorder %s22, 0
      %p237 = por %p235, %p236
      %p238 = scmp.ne.s32.totalorder %s224, %s225
      %p239 = scmp.eq.s32.totalorder %s23, 1
      %p240 = por %p238, %p239
      %p242 = scmp.ne.s32.totalorder %s225, %s241
      %p243 = scmp.eq.s32.totalorder %s23, 0
      %p244 = por %p242, %p243
      %p245 = scmp.le.s32.totalorder 1, %s17
      %p246 = scmp.lt.s32.totalorder %s17, 3
      %p247 = pnand %p245, %p246
      %p248 = pneg %p247
      // Predicated region
      $region9: #{vencoder_forward.1} parent=5 // pred_check
        _
      $region10: #{vencoder_forward.1} parent=5 // pred_check_branch
        %250 = sbr.rel (%p247) target = $region12
      $region11: #{vencoder_forward.1} parent=5 // pred_region
        %s251 = ssub.s32 %s17, 1
        // Predicated region
        $region13: #{vencoder_forward.1} parent=11 // pred_check
          %p252 = pneg %p64
        $region14: #{vencoder_forward.1} parent=11 // pred_check_branch
          %254 = sbr.rel (%p252) target = $region16
        $region15: #{vencoder_forward.1} parent=11 // pred_region
          %s256 = ssub.s32 3072, 3072
          %257 = vsyncadd [#allocation8], %s256
          %s258 = sshll.u32 [#allocation7], 4
          %s259 = int_to_ptr.vmem [resolvable:$true] %s258
          %264 = dma.hbm_to_vmem [thread:$0]  %s1, 3072, %s259, [#allocation8], 128, 128, 8
        $region16: #{vencoder_forward.1} parent=11 // pred_fallthru
          _
        // Predicated region
        $region17: #{vencoder_forward.1} parent=11 // pred_check
          %p265 = pneg %p85
        $region18: #{vencoder_forward.1} parent=11 // pred_check_branch
          %267 = sbr.rel (%p265) target = $region20
        $region19: #{vencoder_forward.1} parent=11 // pred_region
          _
        $region20: #{vencoder_forward.1} parent=11 // pred_fallthru
          _
        // Predicated region
        $region21: #{vencoder_forward.1} parent=11 // pred_check
          %p268 = pneg %p106
        $region22: #{vencoder_forward.1} parent=11 // pred_check_branch
          %270 = sbr.rel (%p268) target = $region24
        $region23: #{vencoder_forward.1} parent=11 // pred_region
          _
        $region24: #{vencoder_forward.1} parent=11 // pred_fallthru
          _
        // Predicated region
        $region25: #{vencoder_forward.1} parent=11 // pred_check
          %p271 = pneg %p127
        $region26: #{vencoder_forward.1} parent=11 // pred_check_branch
          %273 = sbr.rel (%p271) target = $region28
        $region27: #{vencoder_forward.1} parent=11 // pred_region
          _
        $region28: #{vencoder_forward.1} parent=11 // pred_fallthru
          _
        // Predicated region
        $region29: #{vencoder_forward.1} parent=11 // pred_check
          %p274 = pneg %p148
        $region30: #{vencoder_forward.1} parent=11 // pred_check_branch
          %276 = sbr.rel (%p274) target = $region32
        $region31: #{vencoder_forward.1} parent=11 // pred_region
          %s278 = ssub.s32 6144, 6144
          %279 = vsyncadd [#allocation10], %s278
          %s280 = sshll.u32 [#allocation9], 4
          %s281 = int_to_ptr.vmem [resolvable:$true] %s280
          %286 = dma.hbm_to_vmem [thread:$0]  %s5, 6144, %s281, [#allocation10], 128, 128, 8
        $region32: #{vencoder_forward.1} parent=11 // pred_fallthru
          _
        // Predicated region
        $region33: #{vencoder_forward.1} parent=11 // pred_check
          %p287 = pneg %p169
        $region34: #{vencoder_forward.1} parent=11 // pred_check_branch
          %289 = sbr.rel (%p287) target = $region36
        $region35: #{vencoder_forward.1} parent=11 // pred_region
          _
        $region36: #{vencoder_forward.1} parent=11 // pred_fallthru
          _
        // Predicated region
        $region37: #{vencoder_forward.1} parent=11 // pred_check
          %p290 = pneg %p190
        $region38: #{vencoder_forward.1} parent=11 // pred_check_branch
          %292 = sbr.rel (%p290) target = $region40
        $region39: #{vencoder_forward.1} parent=11 // pred_region
          _
        $region40: #{vencoder_forward.1} parent=11 // pred_fallthru
          _
        // Predicated region
        $region41: #{vencoder_forward.1} parent=11 // pred_check
          %p293 = pneg %p211
        $region42: #{vencoder_forward.1} parent=11 // pred_check_branch
          %295 = sbr.rel (%p293) target = $region44
        $region43: #{vencoder_forward.1} parent=11 // pred_region
          _
        $region44: #{vencoder_forward.1} parent=11 // pred_fallthru
          _
      $region12: #{vencoder_forward.1} parent=5 // pred_fallthru
        _
      %p296 = scmp.lt.s32.totalorder %s17, 2
      // Predicated region
      $region45: #{vencoder_forward.1} parent=5 // pred_check
        %p297 = pneg %p296
      $region46: #{vencoder_forward.1} parent=5 // pred_check_branch
        %299 = sbr.rel (%p297) target = $region48
      $region47: #{vencoder_forward.1} parent=5 // pred_region
        // Predicated region
        $region49: #{vencoder_forward.1} parent=47 // pred_check
          %p300 = pneg %p37
        $region50: #{vencoder_forward.1} parent=47 // pred_check_branch
          %302 = sbr.rel (%p300) target = $region52
        $region51: #{vencoder_forward.1} parent=47 // pred_region
          %p303 = scmp.lt.s32.totalorder %s17, 1
          %s304 = scalar_select %p303, %s17, 1
          %s305 = smul.addr %s304, 3
          %s306 = smul.addr %s305, 8
          %s307 = scalar_lea.vmem %s0, %s306
        $region52: #{vencoder_forward.1} parent=47 // pred_fallthru
          _
      $region48: #{vencoder_forward.1} parent=5 // pred_fallthru
        _
      %p308 = scmp.le.s32.totalorder 1, %s17
      %p309 = scmp.lt.s32.totalorder %s17, 3
      %p310 = pnand %p308, %p309
      %p311 = pneg %p310
      // Predicated region
      $region53: #{vencoder_forward.1} parent=5 // pred_check
        _
      $region54: #{vencoder_forward.1} parent=5 // pred_check_branch
        %313 = sbr.rel (%p310) target = $region56
      $region55: #{vencoder_forward.1} parent=5 // pred_region
        %s314 = ssub.s32 %s17, 1
        // Predicated region
        $region57: #{vencoder_forward.1} parent=55 // pred_check
          %p315 = pneg %p64
        $region58: #{vencoder_forward.1} parent=55 // pred_check_branch
          %317 = sbr.rel (%p315) target = $region60
        $region59: #{vencoder_forward.1} parent=55 // pred_region
          %318 = dma.done [#allocation8], 3072
        $region60: #{vencoder_forward.1} parent=55 // pred_fallthru
          _
        // Predicated region
        $region61: #{vencoder_forward.1} parent=55 // pred_check
          %p319 = pneg %p148
        $region62: #{vencoder_forward.1} parent=55 // pred_check_branch
          %321 = sbr.rel (%p319) target = $region64
        $region63: #{vencoder_forward.1} parent=55 // pred_region
          %322 = dma.done [#allocation10], 6144
        $region64: #{vencoder_forward.1} parent=55 // pred_fallthru
          _
        %p323 = scmp.lt.s32.totalorder %s22, 1
        %s324 = scalar_select %p323, %s22, 1
        %s325 = smul.addr %s324, 3
        %s326 = smul.addr %s325, 8
        %s327 = scalar_lea.vmem %s0, %s326
        %p328 = pneg %p43
        %p329 = pneg %p40
        %p330 = pneg %p64
        %p331 = pneg %p61
        %p332 = pneg %p85
        %p333 = pneg %p82
        %p334 = pneg %p106
        %p335 = pneg %p103
        %p336 = pneg %p127
        %p337 = pneg %p124
        %p338 = pneg %p148
        %p339 = pneg %p145
        %p340 = pneg %p169
        %p341 = pneg %p166
        %p342 = pneg %p190
        %p343 = pneg %p187
        %p344 = pneg %p211
        %p345 = pneg %p208
        %p346 = pneg %p237
        %p347 = pneg %p234
        %p348 = scmp.lt.s32.totalorder %s22, 1
        %s349 = scalar_select %p348, %s22, 1
        %s350 = scalar_lea.vmem %s9, %s349
        %p351 = scmp.lt.s32.totalorder %s22, 1
        %s352 = scalar_select %p351, %s22, 1
        %s353 = smul.addr %s352, 3
        %s354 = smul.addr %s353, 8
        %s355 = scalar_lea.vmem %s0, %s354
        %p356 = scmp.lt.s32.totalorder %s22, 1
        %s357 = scalar_select %p356, %s22, 1
        %s358 = scalar_lea.vmem %s9, %s357
        %v359 = vld [vmem:[%s355] sm:$0xff]
        %v360 = vld [vmem:[%s355 + $0x8] sm:$0xff]
        %v361 = vld [vmem:[%s355 + $0x10] sm:$0x3]
        %vm362 = vcmask 523264
        %363 = vst.msk [vmem:[#allocation2] sm:$0xff] %vm362, %v359
        %364 = vst.msk [vmem:[#allocation2 + $0x8] sm:$0xff] %vm362, %v360
        %vm365 = vcmask 517120
        %366 = vst.msk [vmem:[#allocation2 + $0x10] sm:$0x3] %vm365, %v361
        %v367 = vld [vmem:[%s2] sm:$0x1]
        %v369 = vlaneseq
        %v370 = vshrl.u32 %v369, 7
        %v371 = vsub.s32 0, %v370
        %v372 = vrot.slane %v367, %v371
        %v374 = vld [vmem:[#allocation2] ss:$2 sm:$0xff]
        %v375 = vld [vmem:[#allocation7] sm:$0xff]
        %v376 = vld [vmem:[#allocation7 + $0x8] sm:$0xff]
        %v377 = vld [vmem:[#allocation7 + $0x10] sm:$0xff]
        %v378 = vld [vmem:[#allocation7 + $0x18] sm:$0xff]
        %v379 = vld [vmem:[#allocation7 + $0x20] sm:$0xff]
        %v380 = vld [vmem:[#allocation7 + $0x28] sm:$0xff]
        %v381 = vld [vmem:[#allocation7 + $0x30] sm:$0xff]
        %v382 = vld [vmem:[#allocation7 + $0x38] sm:$0xff]
        %v384 = vsel %vm362, %v374, 0
        %386 = vmatprep.subr.mxu0 0.0
        %387 = vmatpush1.msra.mxu0 %v375
        %388 = vmatprep.subr.mxu0 0.0
        %389 = vmatpush1.msra.mxu0 %v376
        %390 = vmatprep.subr.mxu0 0.0
        %391 = vmatpush1.msra.mxu0 %v377
        %392 = vmatprep.subr.mxu0 0.0
        %393 = vmatpush1.msra.mxu0 %v378
        %394 = vmatprep.subr.mxu0 0.0
        %395 = vmatpush1.msra.mxu0 %v379
        %396 = vmatprep.subr.mxu0 0.0
        %397 = vmatpush1.msra.mxu0 %v380
        %398 = vmatprep.subr.mxu0 0.0
        %399 = vmatpush1.msra.mxu0 %v381
        %400 = vmatprep.subr.mxu0 0.0
        %401 = vmatpush1.msra.mxu0 %v382
        %402 = vmatprep.subr.mxu0 0.0
        %403 = vmatpush1.msra.mxu0 0.0
        %404 = vmatprep.subr.mxu0 0.0
        %405 = vmatpush1.msra.mxu0 0.0
        %406 = vmatprep.subr.mxu0 0.0
        %407 = vmatpush1.msra.mxu0 0.0
        %408 = vmatprep.subr.mxu0 0.0
        %409 = vmatpush1.msra.mxu0 0.0
        %410 = vmatprep.subr.mxu0 0.0
        %411 = vmatpush1.msra.mxu0 0.0
        %412 = vmatprep.subr.mxu0 0.0
        %413 = vmatpush1.msra.mxu0 0.0
        %414 = vmatprep.subr.mxu0 0.0
        %415 = vmatpush1.msra.mxu0 0.0
        %416 = vmatprep.subr.mxu0 0.0
        %417 = vmatpush1.msra.mxu0 0.0
        %418 = vmatprep.subr.mxu0 0.0
        %419 = vmatpush1.msra.mxu0 0.0
        %420 = vmatprep.subr.mxu0 0.0
        %421 = vmatpush1.msra.mxu0 0.0
        %422 = vmatprep.subr.mxu0 0.0
        %423 = vmatpush1.msra.mxu0 0.0
        %424 = vmatprep.subr.mxu0 0.0
        %425 = vmatpush1.msra.mxu0 0.0
        %426 = vmatprep.subr.mxu0 0.0
        %427 = vmatpush1.msra.mxu0 0.0
        %428 = vmatprep.subr.mxu0 0.0
        %429 = vmatpush1.msra.mxu0 0.0
        %430 = vmatprep.subr.mxu0 0.0
        %431 = vmatpush1.msra.mxu0 0.0
        %432 = vmatprep.subr.mxu0 0.0
        %433 = vmatpush1.msra.mxu0 0.0
        %434 = vmatprep.subr.mxu0 0.0
        %435 = vmatpush1.msra.mxu0 0.0
        %436 = vmatprep.subr.mxu0 0.0
        %437 = vmatpush1.msra.mxu0 0.0
        %438 = vmatprep.subr.mxu0 0.0
        %439 = vmatpush1.msra.mxu0 0.0
        %440 = vmatprep.subr.mxu0 0.0
        %441 = vmatpush1.msra.mxu0 0.0
        %442 = vmatprep.subr.mxu0 0.0
        %443 = vmatpush1.msra.mxu0 0.0
        %444 = vmatprep.subr.mxu0 0.0
        %445 = vmatpush1.msra.mxu0 0.0
        %446 = vmatprep.subr.mxu0 0.0
        %447 = vmatpush1.msra.mxu0 0.0
        %448 = vmatprep.subr.mxu0 0.0
        %449 = vmatpush1.msra.mxu0 0.0
        %450 = vmatprep.mubr.f32.mxu0 0.0
        %451 = vmatmul.mubr.f32.gmra.mrb[0].mxu0 %v384
        %v452 = vpop.f32.mrb[0].mxu0
        %v453 = vadd.f32 0.0, %v452
        %v454 = vpop.f32.mrb[0].mxu0
        %455 = vdwg.mxu0
        %v456 = vadd.f32 %v372, %v453
        %s457 = scalar_lea.vmem [#allocation2], 1
        %v458 = vld [vmem:[%s457] ss:$2 sm:$0xff]
        %s459 = scalar_lea.vmem [#allocation7], 64
        %v460 = vld [vmem:[%s459] sm:$0xff]
        %v461 = vld [vmem:[%s459 + $0x8] sm:$0xff]
        %v462 = vld [vmem:[%s459 + $0x10] sm:$0xff]
        %v463 = vld [vmem:[%s459 + $0x18] sm:$0xff]
        %v464 = vld [vmem:[%s459 + $0x20] sm:$0xff]
        %v465 = vld [vmem:[%s459 + $0x28] sm:$0xff]
        %v466 = vld [vmem:[%s459 + $0x30] sm:$0xff]
        %v467 = vld [vmem:[%s459 + $0x38] sm:$0xff]
        %v469 = vsel %vm362, %v458, 0
        %471 = vmatprep.subr.mxu0 0.0
        %472 = vmatpush1.msra.mxu0 %v460
        %473 = vmatprep.subr.mxu0 0.0
        %474 = vmatpush1.msra.mxu0 %v461
        %475 = vmatprep.subr.mxu0 0.0
        %476 = vmatpush1.msra.mxu0 %v462
        %477 = vmatprep.subr.mxu0 0.0
        %478 = vmatpush1.msra.mxu0 %v463
        %479 = vmatprep.subr.mxu0 0.0
        %480 = vmatpush1.msra.mxu0 %v464
        %481 = vmatprep.subr.mxu0 0.0
        %482 = vmatpush1.msra.mxu0 %v465
        %483 = vmatprep.subr.mxu0 0.0
        %484 = vmatpush1.msra.mxu0 %v466
        %485 = vmatprep.subr.mxu0 0.0
        %486 = vmatpush1.msra.mxu0 %v467
        %487 = vmatprep.subr.mxu0 0.0
        %488 = vmatpush1.msra.mxu0 0.0
        %489 = vmatprep.subr.mxu0 0.0
        %490 = vmatpush1.msra.mxu0 0.0
        %491 = vmatprep.subr.mxu0 0.0
        %492 = vmatpush1.msra.mxu0 0.0
        %493 = vmatprep.subr.mxu0 0.0
        %494 = vmatpush1.msra.mxu0 0.0
        %495 = vmatprep.subr.mxu0 0.0
        %496 = vmatpush1.msra.mxu0 0.0
        %497 = vmatprep.subr.mxu0 0.0
        %498 = vmatpush1.msra.mxu0 0.0
        %499 = vmatprep.subr.mxu0 0.0
        %500 = vmatpush1.msra.mxu0 0.0
        %501 = vmatprep.subr.mxu0 0.0
        %502 = vmatpush1.msra.mxu0 0.0
        %503 = vmatprep.subr.mxu0 0.0
        %504 = vmatpush1.msra.mxu0 0.0
        %505 = vmatprep.subr.mxu0 0.0
        %506 = vmatpush1.msra.mxu0 0.0
        %507 = vmatprep.subr.mxu0 0.0
        %508 = vmatpush1.msra.mxu0 0.0
        %509 = vmatprep.subr.mxu0 0.0
        %510 = vmatpush1.msra.mxu0 0.0
        %511 = vmatprep.subr.mxu0 0.0
        %512 = vmatpush1.msra.mxu0 0.0
        %513 = vmatprep.subr.mxu0 0.0
        %514 = vmatpush1.msra.mxu0 0.0
        %515 = vmatprep.subr.mxu0 0.0
        %516 = vmatpush1.msra.mxu0 0.0
        %517 = vmatprep.subr.mxu0 0.0
        %518 = vmatpush1.msra.mxu0 0.0
        %519 = vmatprep.subr.mxu0 0.0
        %520 = vmatpush1.msra.mxu0 0.0
        %521 = vmatprep.subr.mxu0 0.0
        %522 = vmatpush1.msra.mxu0 0.0
        %523 = vmatprep.subr.mxu0 0.0
        %524 = vmatpush1.msra.mxu0 0.0
        %525 = vmatprep.subr.mxu0 0.0
        %526 = vmatpush1.msra.mxu0 0.0
        %527 = vmatprep.subr.mxu0 0.0
        %528 = vmatpush1.msra.mxu0 0.0
        %529 = vmatprep.subr.mxu0 0.0
        %530 = vmatpush1.msra.mxu0 0.0
        %531 = vmatprep.subr.mxu0 0.0
        %532 = vmatpush1.msra.mxu0 0.0
        %533 = vmatprep.subr.mxu0 0.0
        %534 = vmatpush1.msra.mxu0 0.0
        %535 = vmatprep.mubr.f32.mxu0 0.0
        %536 = vmatmul.mubr.f32.gmra.mrb[0].mxu0 %v469
        %v537 = vpop.f32.mrb[0].mxu0
        %v538 = vadd.f32 0.0, %v537
        %v539 = vpop.f32.mrb[0].mxu0
        %540 = vdwg.mxu0
        %v541 = vadd.f32 %v456, %v538
        %s542 = scalar_lea.vmem [#allocation2], 2
        %v543 = vld [vmem:[%s542] ss:$2 sm:$0xff]
        %s544 = scalar_lea.vmem [#allocation7], 128
        %v545 = vld [vmem:[%s544] sm:$0xff]
        %v546 = vld [vmem:[%s544 + $0x8] sm:$0xff]
        %v547 = vld [vmem:[%s544 + $0x10] sm:$0xff]
        %v548 = vld [vmem:[%s544 + $0x18] sm:$0xff]
        %v549 = vld [vmem:[%s544 + $0x20] sm:$0xff]
        %v550 = vld [vmem:[%s544 + $0x28] sm:$0xff]
        %v551 = vld [vmem:[%s544 + $0x30] sm:$0xff]
        %v552 = vld [vmem:[%s544 + $0x38] sm:$0xff]
        %v554 = vsel %vm362, %v543, 0
        %556 = vmatprep.subr.mxu0 0.0
        %557 = vmatpush1.msra.mxu0 %v545
        %558 = vmatprep.subr.mxu0 0.0
        %559 = vmatpush1.msra.mxu0 %v546
        %560 = vmatprep.subr.mxu0 0.0
        %561 = vmatpush1.msra.mxu0 %v547
        %562 = vmatprep.subr.mxu0 0.0
        %563 = vmatpush1.msra.mxu0 %v548
        %564 = vmatprep.subr.mxu0 0.0
        %565 = vmatpush1.msra.mxu0 %v549
        %566 = vmatprep.subr.mxu0 0.0
        %567 = vmatpush1.msra.mxu0 %v550
        %568 = vmatprep.subr.mxu0 0.0
        %569 = vmatpush1.msra.mxu0 %v551
        %570 = vmatprep.subr.mxu0 0.0
        %571 = vmatpush1.msra.mxu0 %v552
        %572 = vmatprep.subr.mxu0 0.0
        %573 = vmatpush1.msra.mxu0 0.0
        %574 = vmatprep.subr.mxu0 0.0
        %575 = vmatpush1.msra.mxu0 0.0
        %576 = vmatprep.subr.mxu0 0.0
        %577 = vmatpush1.msra.mxu0 0.0
        %578 = vmatprep.subr.mxu0 0.0
        %579 = vmatpush1.msra.mxu0 0.0
        %580 = vmatprep.subr.mxu0 0.0
        %581 = vmatpush1.msra.mxu0 0.0
        %582 = vmatprep.subr.mxu0 0.0
        %583 = vmatpush1.msra.mxu0 0.0
        %584 = vmatprep.subr.mxu0 0.0
        %585 = vmatpush1.msra.mxu0 0.0
        %586 = vmatprep.subr.mxu0 0.0
        %587 = vmatpush1.msra.mxu0 0.0
        %588 = vmatprep.subr.mxu0 0.0
        %589 = vmatpush1.msra.mxu0 0.0
        %590 = vmatprep.subr.mxu0 0.0
        %591 = vmatpush1.msra.mxu0 0.0
        %592 = vmatprep.subr.mxu0 0.0
        %593 = vmatpush1.msra.mxu0 0.0
        %594 = vmatprep.subr.mxu0 0.0
        %595 = vmatpush1.msra.mxu0 0.0
        %596 = vmatprep.subr.mxu0 0.0
        %597 = vmatpush1.msra.mxu0 0.0
        %598 = vmatprep.subr.mxu0 0.0
        %599 = vmatpush1.msra.mxu0 0.0
        %600 = vmatprep.subr.mxu0 0.0
        %601 = vmatpush1.msra.mxu0 0.0
        %602 = vmatprep.subr.mxu0 0.0
        %603 = vmatpush1.msra.mxu0 0.0
        %604 = vmatprep.subr.mxu0 0.0
        %605 = vmatpush1.msra.mxu0 0.0
        %606 = vmatprep.subr.mxu0 0.0
        %607 = vmatpush1.msra.mxu0 0.0
        %608 = vmatprep.subr.mxu0 0.0
        %609 = vmatpush1.msra.mxu0 0.0
        %610 = vmatprep.subr.mxu0 0.0
        %611 = vmatpush1.msra.mxu0 0.0
        %612 = vmatprep.subr.mxu0 0.0
        %613 = vmatpush1.msra.mxu0 0.0
        %614 = vmatprep.subr.mxu0 0.0
        %615 = vmatpush1.msra.mxu0 0.0
        %616 = vmatprep.subr.mxu0 0.0
        %617 = vmatpush1.msra.mxu0 0.0
        %618 = vmatprep.subr.mxu0 0.0
        %619 = vmatpush1.msra.mxu0 0.0
        %620 = vmatprep.mubr.f32.mxu0 0.0
        %621 = vmatmul.mubr.f32.gmra.mrb[0].mxu0 %v554
        %v622 = vpop.f32.mrb[0].mxu0
        %v623 = vadd.f32 0.0, %v622
        %v624 = vpop.f32.mrb[0].mxu0
        %625 = vdwg.mxu0
        %v626 = vadd.f32 %v541, %v623
        %v627 = vmax.f32 %v626, 0.0
        %628 = vst [vmem:[#allocation3] sm:$0x1] 0.0
        %629 = vst [vmem:[#allocation3 + $0x9] sm:$0x1] 0.0
        %630 = vst [vmem:[#allocation3 + $0x1] sm:$0xff] %v627
        %v631 = vld [vmem:[%s4] sm:$0x1]
        %v633 = vlaneseq
        %v634 = vshrl.u32 %v633, 7
        %v635 = vsub.s32 0, %v634
        %v636 = vrot.slane %v631, %v635
        %v638 = vld [vmem:[#allocation3] ss:$2 sm:$0xf]
        %v639 = vld [vmem:[%s3] sm:$0xff]
        %v640 = vld [vmem:[%s3 + $0x8] sm:$0xff]
        %v641 = vld [vmem:[%s3 + $0x10] sm:$0xff]
        %v642 = vld [vmem:[%s3 + $0x18] sm:$0xff]
        %v643 = vld [vmem:[%s3 + $0x20] sm:$0xff]
        %v644 = vld [vmem:[%s3 + $0x28] sm:$0xff]
        %v645 = vld [vmem:[%s3 + $0x30] sm:$0xff]
        %v646 = vld [vmem:[%s3 + $0x38] sm:$0xff]
        %v647 = vld [vmem:[%s3 + $0x40] sm:$0xff]
        %v648 = vld [vmem:[%s3 + $0x48] sm:$0xff]
        %v649 = vld [vmem:[%s3 + $0x50] sm:$0xff]
        %v650 = vld [vmem:[%s3 + $0x58] sm:$0xff]
        %v651 = vld [vmem:[%s3 + $0x60] sm:$0xff]
        %v652 = vld [vmem:[%s3 + $0x68] sm:$0xff]
        %v653 = vld [vmem:[%s3 + $0x70] sm:$0xff]
        %v654 = vld [vmem:[%s3 + $0x78] sm:$0xff]
        %655 = vmatprep.subr.mxu0 0.0
        %656 = vmatpush1.msra.mxu0 %v639
        %657 = vmatprep.subr.mxu0 0.0
        %658 = vmatpush1.msra.mxu0 %v640
        %659 = vmatprep.subr.mxu0 0.0
        %660 = vmatpush1.msra.mxu0 %v641
        %661 = vmatprep.subr.mxu0 0.0
        %662 = vmatpush1.msra.mxu0 %v642
        %663 = vmatprep.subr.mxu0 0.0
        %664 = vmatpush1.msra.mxu0 %v643
        %665 = vmatprep.subr.mxu0 0.0
        %666 = vmatpush1.msra.mxu0 %v644
        %667 = vmatprep.subr.mxu0 0.0
        %668 = vmatpush1.msra.mxu0 %v645
        %669 = vmatprep.subr.mxu0 0.0
        %670 = vmatpush1.msra.mxu0 %v646
        %671 = vmatprep.subr.mxu0 0.0
        %672 = vmatpush1.msra.mxu0 %v647
        %673 = vmatprep.subr.mxu0 0.0
        %674 = vmatpush1.msra.mxu0 %v648
        %675 = vmatprep.subr.mxu0 0.0
        %676 = vmatpush1.msra.mxu0 %v649
        %677 = vmatprep.subr.mxu0 0.0
        %678 = vmatpush1.msra.mxu0 %v650
        %679 = vmatprep.subr.mxu0 0.0
        %680 = vmatpush1.msra.mxu0 %v651
        %681 = vmatprep.subr.mxu0 0.0
        %682 = vmatpush1.msra.mxu0 %v652
        %683 = vmatprep.subr.mxu0 0.0
        %684 = vmatpush1.msra.mxu0 %v653
        %685 = vmatprep.subr.mxu0 0.0
        %686 = vmatpush1.msra.mxu0 %v654
        %687 = vmatprep.subr.mxu0 0.0
        %688 = vmatpush1.msra.mxu0 0.0
        %689 = vmatprep.subr.mxu0 0.0
        %690 = vmatpush1.msra.mxu0 0.0
        %691 = vmatprep.subr.mxu0 0.0
        %692 = vmatpush1.msra.mxu0 0.0
        %693 = vmatprep.subr.mxu0 0.0
        %694 = vmatpush1.msra.mxu0 0.0
        %695 = vmatprep.subr.mxu0 0.0
        %696 = vmatpush1.msra.mxu0 0.0
        %697 = vmatprep.subr.mxu0 0.0
        %698 = vmatpush1.msra.mxu0 0.0
        %699 = vmatprep.subr.mxu0 0.0
        %700 = vmatpush1.msra.mxu0 0.0
        %701 = vmatprep.subr.mxu0 0.0
        %702 = vmatpush1.msra.mxu0 0.0
        %703 = vmatprep.subr.mxu0 0.0
        %704 = vmatpush1.msra.mxu0 0.0
        %705 = vmatprep.subr.mxu0 0.0
        %706 = vmatpush1.msra.mxu0 0.0
        %707 = vmatprep.subr.mxu0 0.0
        %708 = vmatpush1.msra.mxu0 0.0
        %709 = vmatprep.subr.mxu0 0.0
        %710 = vmatpush1.msra.mxu0 0.0
        %711 = vmatprep.subr.mxu0 0.0
        %712 = vmatpush1.msra.mxu0 0.0
        %713 = vmatprep.subr.mxu0 0.0
        %714 = vmatpush1.msra.mxu0 0.0
        %715 = vmatprep.subr.mxu0 0.0
        %716 = vmatpush1.msra.mxu0 0.0
        %717 = vmatprep.subr.mxu0 0.0
        %718 = vmatpush1.msra.mxu0 0.0
        %719 = vmatprep.mubr.f32.mxu0 0.0
        %720 = vmatmul.mubr.f32.gmra.mrb[0].mxu0 %v638
        %v721 = vpop.f32.mrb[0].mxu0
        %v722 = vadd.f32 0.0, %v721
        %v723 = vpop.f32.mrb[0].mxu0
        %724 = vdwg.mxu0
        %v725 = vadd.f32 %v636, %v722
        %s726 = scalar_lea.vmem [#allocation3], 1
        %v727 = vld [vmem:[%s726] ss:$2 sm:$0xf]
        %s728 = scalar_lea.vmem %s3, 128
        %v729 = vld [vmem:[%s728] sm:$0xff]
        %v730 = vld [vmem:[%s728 + $0x8] sm:$0xff]
        %v731 = vld [vmem:[%s728 + $0x10] sm:$0xff]
        %v732 = vld [vmem:[%s728 + $0x18] sm:$0xff]
        %v733 = vld [vmem:[%s728 + $0x20] sm:$0xff]
        %v734 = vld [vmem:[%s728 + $0x28] sm:$0xff]
        %v735 = vld [vmem:[%s728 + $0x30] sm:$0xff]
        %v736 = vld [vmem:[%s728 + $0x38] sm:$0xff]
        %v737 = vld [vmem:[%s728 + $0x40] sm:$0xff]
        %v738 = vld [vmem:[%s728 + $0x48] sm:$0xff]
        %v739 = vld [vmem:[%s728 + $0x50] sm:$0xff]
        %v740 = vld [vmem:[%s728 + $0x58] sm:$0xff]
        %v741 = vld [vmem:[%s728 + $0x60] sm:$0xff]
        %v742 = vld [vmem:[%s728 + $0x68] sm:$0xff]
        %v743 = vld [vmem:[%s728 + $0x70] sm:$0xff]
        %v744 = vld [vmem:[%s728 + $0x78] sm:$0xff]
        %745 = vmatprep.subr.mxu0 0.0
        %746 = vmatpush1.msra.mxu0 %v729
        %747 = vmatprep.subr.mxu0 0.0
        %748 = vmatpush1.msra.mxu0 %v730
        %749 = vmatprep.subr.mxu0 0.0
        %750 = vmatpush1.msra.mxu0 %v731
        %751 = vmatprep.subr.mxu0 0.0
        %752 = vmatpush1.msra.mxu0 %v732
        %753 = vmatprep.subr.mxu0 0.0
        %754 = vmatpush1.msra.mxu0 %v733
        %755 = vmatprep.subr.mxu0 0.0
        %756 = vmatpush1.msra.mxu0 %v734
        %757 = vmatprep.subr.mxu0 0.0
        %758 = vmatpush1.msra.mxu0 %v735
        %759 = vmatprep.subr.mxu0 0.0
        %760 = vmatpush1.msra.mxu0 %v736
        %761 = vmatprep.subr.mxu0 0.0
        %762 = vmatpush1.msra.mxu0 %v737
        %763 = vmatprep.subr.mxu0 0.0
        %764 = vmatpush1.msra.mxu0 %v738
        %765 = vmatprep.subr.mxu0 0.0
        %766 = vmatpush1.msra.mxu0 %v739
        %767 = vmatprep.subr.mxu0 0.0
        %768 = vmatpush1.msra.mxu0 %v740
        %769 = vmatprep.subr.mxu0 0.0
        %770 = vmatpush1.msra.mxu0 %v741
        %771 = vmatprep.subr.mxu0 0.0
        %772 = vmatpush1.msra.mxu0 %v742
        %773 = vmatprep.subr.mxu0 0.0
        %774 = vmatpush1.msra.mxu0 %v743
        %775 = vmatprep.subr.mxu0 0.0
        %776 = vmatpush1.msra.mxu0 %v744
        %777 = vmatprep.subr.mxu0 0.0
        %778 = vmatpush1.msra.mxu0 0.0
        %779 = vmatprep.subr.mxu0 0.0
        %780 = vmatpush1.msra.mxu0 0.0
        %781 = vmatprep.subr.mxu0 0.0
        %782 = vmatpush1.msra.mxu0 0.0
        %783 = vmatprep.subr.mxu0 0.0
        %784 = vmatpush1.msra.mxu0 0.0
        %785 = vmatprep.subr.mxu0 0.0
        %786 = vmatpush1.msra.mxu0 0.0
        %787 = vmatprep.subr.mxu0 0.0
        %788 = vmatpush1.msra.mxu0 0.0
        %789 = vmatprep.subr.mxu0 0.0
        %790 = vmatpush1.msra.mxu0 0.0
        %791 = vmatprep.subr.mxu0 0.0
        %792 = vmatpush1.msra.mxu0 0.0
        %793 = vmatprep.subr.mxu0 0.0
        %794 = vmatpush1.msra.mxu0 0.0
        %795 = vmatprep.subr.mxu0 0.0
        %796 = vmatpush1.msra.mxu0 0.0
        %797 = vmatprep.subr.mxu0 0.0
        %798 = vmatpush1.msra.mxu0 0.0
        %799 = vmatprep.subr.mxu0 0.0
        %800 = vmatpush1.msra.mxu0 0.0
        %801 = vmatprep.subr.mxu0 0.0
        %802 = vmatpush1.msra.mxu0 0.0
        %803 = vmatprep.subr.mxu0 0.0
        %804 = vmatpush1.msra.mxu0 0.0
        %805 = vmatprep.subr.mxu0 0.0
        %806 = vmatpush1.msra.mxu0 0.0
        %807 = vmatprep.subr.mxu0 0.0
        %808 = vmatpush1.msra.mxu0 0.0
        %809 = vmatprep.mubr.f32.mxu0 0.0
        %810 = vmatmul.mubr.f32.gmra.mrb[0].mxu0 %v727
        %v811 = vpop.f32.mrb[0].mxu0
        %v812 = vadd.f32 0.0, %v811
        %v813 = vpop.f32.mrb[0].mxu0
        %814 = vdwg.mxu0
        %v815 = vadd.f32 %v725, %v812
        %s816 = scalar_lea.vmem [#allocation3], 2
        %v817 = vld [vmem:[%s816] ss:$2 sm:$0xf]
        %s818 = scalar_lea.vmem %s3, 256
        %v819 = vld [vmem:[%s818] sm:$0xff]
        %v820 = vld [vmem:[%s818 + $0x8] sm:$0xff]
        %v821 = vld [vmem:[%s818 + $0x10] sm:$0xff]
        %v822 = vld [vmem:[%s818 + $0x18] sm:$0xff]
        %v823 = vld [vmem:[%s818 + $0x20] sm:$0xff]
        %v824 = vld [vmem:[%s818 + $0x28] sm:$0xff]
        %v825 = vld [vmem:[%s818 + $0x30] sm:$0xff]
        %v826 = vld [vmem:[%s818 + $0x38] sm:$0xff]
        %v827 = vld [vmem:[%s818 + $0x40] sm:$0xff]
        %v828 = vld [vmem:[%s818 + $0x48] sm:$0xff]
        %v829 = vld [vmem:[%s818 + $0x50] sm:$0xff]
        %v830 = vld [vmem:[%s818 + $0x58] sm:$0xff]
        %v831 = vld [vmem:[%s818 + $0x60] sm:$0xff]
        %v832 = vld [vmem:[%s818 + $0x68] sm:$0xff]
        %v833 = vld [vmem:[%s818 + $0x70] sm:$0xff]
        %v834 = vld [vmem:[%s818 + $0x78] sm:$0xff]
        %835 = vmatprep.subr.mxu0 0.0
        %836 = vmatpush1.msra.mxu0 %v819
        %837 = vmatprep.subr.mxu0 0.0
        %838 = vmatpush1.msra.mxu0 %v820
        %839 = vmatprep.subr.mxu0 0.0
        %840 = vmatpush1.msra.mxu0 %v821
        %841 = vmatprep.subr.mxu0 0.0
        %842 = vmatpush1.msra.mxu0 %v822
        %843 = vmatprep.subr.mxu0 0.0
        %844 = vmatpush1.msra.mxu0 %v823
        %845 = vmatprep.subr.mxu0 0.0
        %846 = vmatpush1.msra.mxu0 %v824
        %847 = vmatprep.subr.mxu0 0.0
        %848 = vmatpush1.msra.mxu0 %v825
        %849 = vmatprep.subr.mxu0 0.0
        %850 = vmatpush1.msra.mxu0 %v826
        %851 = vmatprep.subr.mxu0 0.0
        %852 = vmatpush1.msra.mxu0 %v827
        %853 = vmatprep.subr.mxu0 0.0
        %854 = vmatpush1.msra.mxu0 %v828
        %855 = vmatprep.subr.mxu0 0.0
        %856 = vmatpush1.msra.mxu0 %v829
        %857 = vmatprep.subr.mxu0 0.0
        %858 = vmatpush1.msra.mxu0 %v830
        %859 = vmatprep.subr.mxu0 0.0
        %860 = vmatpush1.msra.mxu0 %v831
        %861 = vmatprep.subr.mxu0 0.0
        %862 = vmatpush1.msra.mxu0 %v832
        %863 = vmatprep.subr.mxu0 0.0
        %864 = vmatpush1.msra.mxu0 %v833
        %865 = vmatprep.subr.mxu0 0.0
        %866 = vmatpush1.msra.mxu0 %v834
        %867 = vmatprep.subr.mxu0 0.0
        %868 = vmatpush1.msra.mxu0 0.0
        %869 = vmatprep.subr.mxu0 0.0
        %870 = vmatpush1.msra.mxu0 0.0
        %871 = vmatprep.subr.mxu0 0.0
        %872 = vmatpush1.msra.mxu0 0.0
        %873 = vmatprep.subr.mxu0 0.0
        %874 = vmatpush1.msra.mxu0 0.0
        %875 = vmatprep.subr.mxu0 0.0
        %876 = vmatpush1.msra.mxu0 0.0
        %877 = vmatprep.subr.mxu0 0.0
        %878 = vmatpush1.msra.mxu0 0.0
        %879 = vmatprep.subr.mxu0 0.0
        %880 = vmatpush1.msra.mxu0 0.0
        %881 = vmatprep.subr.mxu0 0.0
        %882 = vmatpush1.msra.mxu0 0.0
        %883 = vmatprep.subr.mxu0 0.0
        %884 = vmatpush1.msra.mxu0 0.0
        %885 = vmatprep.subr.mxu0 0.0
        %886 = vmatpush1.msra.mxu0 0.0
        %887 = vmatprep.subr.mxu0 0.0
        %888 = vmatpush1.msra.mxu0 0.0
        %889 = vmatprep.subr.mxu0 0.0
        %890 = vmatpush1.msra.mxu0 0.0
        %891 = vmatprep.subr.mxu0 0.0
        %892 = vmatpush1.msra.mxu0 0.0
        %893 = vmatprep.subr.mxu0 0.0
        %894 = vmatpush1.msra.mxu0 0.0
        %895 = vmatprep.subr.mxu0 0.0
        %896 = vmatpush1.msra.mxu0 0.0
        %897 = vmatprep.subr.mxu0 0.0
        %898 = vmatpush1.msra.mxu0 0.0
        %899 = vmatprep.mubr.f32.mxu0 0.0
        %900 = vmatmul.mubr.f32.gmra.mrb[0].mxu0 %v817
        %v901 = vpop.f32.mrb[0].mxu0
        %v902 = vadd.f32 0.0, %v901
        %v903 = vpop.f32.mrb[0].mxu0
        %904 = vdwg.mxu0
        %v905 = vadd.f32 %v815, %v902
        %v906 = vmax.f32 %v905, 0.0
        %907 = vst [vmem:[#allocation4] sm:$0x1] 0.0
        %908 = vst [vmem:[#allocation4 + $0x5] sm:$0x1] 0.0
        %909 = vst [vmem:[#allocation4 + $0x1] sm:$0xf] %v906
        %v910 = vld [vmem:[%s6] sm:$0x1]
        %v912 = vlaneseq
        %v913 = vshrl.u32 %v912, 7
        %v914 = vsub.s32 0, %v913
        %v915 = vrot.slane %v910, %v914
        %v917 = vld [vmem:[#allocation4] ss:$2 sm:$0x3]
        %v918 = vld [vmem:[#allocation9] sm:$0xff]
        %v919 = vld [vmem:[#allocation9 + $0x8] sm:$0xff]
        %v920 = vld [vmem:[#allocation9 + $0x10] sm:$0xff]
        %v921 = vld [vmem:[#allocation9 + $0x18] sm:$0xff]
        %v922 = vld [vmem:[#allocation9 + $0x20] sm:$0xff]
        %v923 = vld [vmem:[#allocation9 + $0x28] sm:$0xff]
        %v924 = vld [vmem:[#allocation9 + $0x30] sm:$0xff]
        %v925 = vld [vmem:[#allocation9 + $0x38] sm:$0xff]
        %v926 = vld [vmem:[#allocation9 + $0x40] sm:$0xff]
        %v927 = vld [vmem:[#allocation9 + $0x48] sm:$0xff]
        %v928 = vld [vmem:[#allocation9 + $0x50] sm:$0xff]
        %v929 = vld [vmem:[#allocation9 + $0x58] sm:$0xff]
        %v930 = vld [vmem:[#allocation9 + $0x60] sm:$0xff]
        %v931 = vld [vmem:[#allocation9 + $0x68] sm:$0xff]
        %v932 = vld [vmem:[#allocation9 + $0x70] sm:$0xff]
        %v933 = vld [vmem:[#allocation9 + $0x78] sm:$0xff]
        %934 = vmatprep.subr.mxu0 0.0
        %935 = vmatpush1.msra.mxu0 %v918
        %936 = vmatprep.subr.mxu0 0.0
        %937 = vmatpush1.msra.mxu0 %v919
        %938 = vmatprep.subr.mxu0 0.0
        %939 = vmatpush1.msra.mxu0 %v920
        %940 = vmatprep.subr.mxu0 0.0
        %941 = vmatpush1.msra.mxu0 %v921
        %942 = vmatprep.subr.mxu0 0.0
        %943 = vmatpush1.msra.mxu0 %v922
        %944 = vmatprep.subr.mxu0 0.0
        %945 = vmatpush1.msra.mxu0 %v923
        %946 = vmatprep.subr.mxu0 0.0
        %947 = vmatpush1.msra.mxu0 %v924
        %948 = vmatprep.subr.mxu0 0.0
        %949 = vmatpush1.msra.mxu0 %v925
        %950 = vmatprep.subr.mxu0 0.0
        %951 = vmatpush1.msra.mxu0 %v926
        %952 = vmatprep.subr.mxu0 0.0
        %953 = vmatpush1.msra.mxu0 %v927
        %954 = vmatprep.subr.mxu0 0.0
        %955 = vmatpush1.msra.mxu0 %v928
        %956 = vmatprep.subr.mxu0 0.0
        %957 = vmatpush1.msra.mxu0 %v929
        %958 = vmatprep.subr.mxu0 0.0
        %959 = vmatpush1.msra.mxu0 %v930
        %960 = vmatprep.subr.mxu0 0.0
        %961 = vmatpush1.msra.mxu0 %v931
        %962 = vmatprep.subr.mxu0 0.0
        %963 = vmatpush1.msra.mxu0 %v932
        %964 = vmatprep.subr.mxu0 0.0
        %965 = vmatpush1.msra.mxu0 %v933
        %966 = vmatprep.subr.mxu0 0.0
        %967 = vmatpush1.msra.mxu0 0.0
        %968 = vmatprep.subr.mxu0 0.0
        %969 = vmatpush1.msra.mxu0 0.0
        %970 = vmatprep.subr.mxu0 0.0
        %971 = vmatpush1.msra.mxu0 0.0
        %972 = vmatprep.subr.mxu0 0.0
        %973 = vmatpush1.msra.mxu0 0.0
        %974 = vmatprep.subr.mxu0 0.0
        %975 = vmatpush1.msra.mxu0 0.0
        %976 = vmatprep.subr.mxu0 0.0
        %977 = vmatpush1.msra.mxu0 0.0
        %978 = vmatprep.subr.mxu0 0.0
        %979 = vmatpush1.msra.mxu0 0.0
        %980 = vmatprep.subr.mxu0 0.0
        %981 = vmatpush1.msra.mxu0 0.0
        %982 = vmatprep.subr.mxu0 0.0
        %983 = vmatpush1.msra.mxu0 0.0
        %984 = vmatprep.subr.mxu0 0.0
        %985 = vmatpush1.msra.mxu0 0.0
        %986 = vmatprep.subr.mxu0 0.0
        %987 = vmatpush1.msra.mxu0 0.0
        %988 = vmatprep.subr.mxu0 0.0
        %989 = vmatpush1.msra.mxu0 0.0
        %990 = vmatprep.subr.mxu0 0.0
        %991 = vmatpush1.msra.mxu0 0.0
        %992 = vmatprep.subr.mxu0 0.0
        %993 = vmatpush1.msra.mxu0 0.0
        %994 = vmatprep.subr.mxu0 0.0
        %995 = vmatpush1.msra.mxu0 0.0
        %996 = vmatprep.subr.mxu0 0.0
        %997 = vmatpush1.msra.mxu0 0.0
        %998 = vmatprep.mubr.f32.mxu0 0.0
        %999 = vmatmul.mubr.f32.gmra.mrb[0].mxu0 %v917
        %v1000 = vpop.f32.mrb[0].mxu0
        %v1001 = vadd.f32 0.0, %v1000
        %v1002 = vpop.f32.mrb[0].mxu0
        %1003 = vdwg.mxu0
        %v1004 = vadd.f32 %v915, %v1001
        %s1005 = scalar_lea.vmem [#allocation4], 1
        %v1006 = vld [vmem:[%s1005] ss:$2 sm:$0x3]
        %s1007 = scalar_lea.vmem [#allocation9], 128
        %v1008 = vld [vmem:[%s1007] sm:$0xff]
        %v1009 = vld [vmem:[%s1007 + $0x8] sm:$0xff]
        %v1010 = vld [vmem:[%s1007 + $0x10] sm:$0xff]
        %v1011 = vld [vmem:[%s1007 + $0x18] sm:$0xff]
        %v1012 = vld [vmem:[%s1007 + $0x20] sm:$0xff]
        %v1013 = vld [vmem:[%s1007 + $0x28] sm:$0xff]
        %v1014 = vld [vmem:[%s1007 + $0x30] sm:$0xff]
        %v1015 = vld [vmem:[%s1007 + $0x38] sm:$0xff]
        %v1016 = vld [vmem:[%s1007 + $0x40] sm:$0xff]
        %v1017 = vld [vmem:[%s1007 + $0x48] sm:$0xff]
        %v1018 = vld [vmem:[%s1007 + $0x50] sm:$0xff]
        %v1019 = vld [vmem:[%s1007 + $0x58] sm:$0xff]
        %v1020 = vld [vmem:[%s1007 + $0x60] sm:$0xff]
        %v1021 = vld [vmem:[%s1007 + $0x68] sm:$0xff]
        %v1022 = vld [vmem:[%s1007 + $0x70] sm:$0xff]
        %v1023 = vld [vmem:[%s1007 + $0x78] sm:$0xff]
        %1024 = vmatprep.subr.mxu0 0.0
        %1025 = vmatpush1.msra.mxu0 %v1008
        %1026 = vmatprep.subr.mxu0 0.0
        %1027 = vmatpush1.msra.mxu0 %v1009
        %1028 = vmatprep.subr.mxu0 0.0
        %1029 = vmatpush1.msra.mxu0 %v1010
        %1030 = vmatprep.subr.mxu0 0.0
        %1031 = vmatpush1.msra.mxu0 %v1011
        %1032 = vmatprep.subr.mxu0 0.0
        %1033 = vmatpush1.msra.mxu0 %v1012
        %1034 = vmatprep.subr.mxu0 0.0
        %1035 = vmatpush1.msra.mxu0 %v1013
        %1036 = vmatprep.subr.mxu0 0.0
        %1037 = vmatpush1.msra.mxu0 %v1014
        %1038 = vmatprep.subr.mxu0 0.0
        %1039 = vmatpush1.msra.mxu0 %v1015
        %1040 = vmatprep.subr.mxu0 0.0
        %1041 = vmatpush1.msra.mxu0 %v1016
        %1042 = vmatprep.subr.mxu0 0.0
        %1043 = vmatpush1.msra.mxu0 %v1017
        %1044 = vmatprep.subr.mxu0 0.0
        %1045 = vmatpush1.msra.mxu0 %v1018
        %1046 = vmatprep.subr.mxu0 0.0
        %1047 = vmatpush1.msra.mxu0 %v1019
        %1048 = vmatprep.subr.mxu0 0.0
        %1049 = vmatpush1.msra.mxu0 %v1020
        %1050 = vmatprep.subr.mxu0 0.0
        %1051 = vmatpush1.msra.mxu0 %v1021
        %1052 = vmatprep.subr.mxu0 0.0
        %1053 = vmatpush1.msra.mxu0 %v1022
        %1054 = vmatprep.subr.mxu0 0.0
        %1055 = vmatpush1.msra.mxu0 %v1023
        %1056 = vmatprep.subr.mxu0 0.0
        %1057 = vmatpush1.msra.mxu0 0.0
        %1058 = vmatprep.subr.mxu0 0.0
        %1059 = vmatpush1.msra.mxu0 0.0
        %1060 = vmatprep.subr.mxu0 0.0
        %1061 = vmatpush1.msra.mxu0 0.0
        %1062 = vmatprep.subr.mxu0 0.0
        %1063 = vmatpush1.msra.mxu0 0.0
        %1064 = vmatprep.subr.mxu0 0.0
        %1065 = vmatpush1.msra.mxu0 0.0
        %1066 = vmatprep.subr.mxu0 0.0
        %1067 = vmatpush1.msra.mxu0 0.0
        %1068 = vmatprep.subr.mxu0 0.0
        %1069 = vmatpush1.msra.mxu0 0.0
        %1070 = vmatprep.subr.mxu0 0.0
        %1071 = vmatpush1.msra.mxu0 0.0
        %1072 = vmatprep.subr.mxu0 0.0
        %1073 = vmatpush1.msra.mxu0 0.0
        %1074 = vmatprep.subr.mxu0 0.0
        %1075 = vmatpush1.msra.mxu0 0.0
        %1076 = vmatprep.subr.mxu0 0.0
        %1077 = vmatpush1.msra.mxu0 0.0
        %1078 = vmatprep.subr.mxu0 0.0
        %1079 = vmatpush1.msra.mxu0 0.0
        %1080 = vmatprep.subr.mxu0 0.0
        %1081 = vmatpush1.msra.mxu0 0.0
        %1082 = vmatprep.subr.mxu0 0.0
        %1083 = vmatpush1.msra.mxu0 0.0
        %1084 = vmatprep.subr.mxu0 0.0
        %1085 = vmatpush1.msra.mxu0 0.0
        %1086 = vmatprep.subr.mxu0 0.0
        %1087 = vmatpush1.msra.mxu0 0.0
        %1088 = vmatprep.mubr.f32.mxu0 0.0
        %1089 = vmatmul.mubr.f32.gmra.mrb[0].mxu0 %v1006
        %v1090 = vpop.f32.mrb[0].mxu0
        %v1091 = vadd.f32 0.0, %v1090
        %v1092 = vpop.f32.mrb[0].mxu0
        %1093 = vdwg.mxu0
        %v1094 = vadd.f32 %v1004, %v1091
        %s1095 = scalar_lea.vmem [#allocation4], 2
        %v1096 = vld [vmem:[%s1095] ss:$2 sm:$0x3]
        %s1097 = scalar_lea.vmem [#allocation9], 256
        %v1098 = vld [vmem:[%s1097] sm:$0xff]
        %v1099 = vld [vmem:[%s1097 + $0x8] sm:$0xff]
        %v1100 = vld [vmem:[%s1097 + $0x10] sm:$0xff]
        %v1101 = vld [vmem:[%s1097 + $0x18] sm:$0xff]
        %v1102 = vld [vmem:[%s1097 + $0x20] sm:$0xff]
        %v1103 = vld [vmem:[%s1097 + $0x28] sm:$0xff]
        %v1104 = vld [vmem:[%s1097 + $0x30] sm:$0xff]
        %v1105 = vld [vmem:[%s1097 + $0x38] sm:$0xff]
        %v1106 = vld [vmem:[%s1097 + $0x40] sm:$0xff]
        %v1107 = vld [vmem:[%s1097 + $0x48] sm:$0xff]
        %v1108 = vld [vmem:[%s1097 + $0x50] sm:$0xff]
        %v1109 = vld [vmem:[%s1097 + $0x58] sm:$0xff]
        %v1110 = vld [vmem:[%s1097 + $0x60] sm:$0xff]
        %v1111 = vld [vmem:[%s1097 + $0x68] sm:$0xff]
        %v1112 = vld [vmem:[%s1097 + $0x70] sm:$0xff]
        %v1113 = vld [vmem:[%s1097 + $0x78] sm:$0xff]
        %1114 = vmatprep.subr.mxu0 0.0
        %1115 = vmatpush1.msra.mxu0 %v1098
        %1116 = vmatprep.subr.mxu0 0.0
        %1117 = vmatpush1.msra.mxu0 %v1099
        %1118 = vmatprep.subr.mxu0 0.0
        %1119 = vmatpush1.msra.mxu0 %v1100
        %1120 = vmatprep.subr.mxu0 0.0
        %1121 = vmatpush1.msra.mxu0 %v1101
        %1122 = vmatprep.subr.mxu0 0.0
        %1123 = vmatpush1.msra.mxu0 %v1102
        %1124 = vmatprep.subr.mxu0 0.0
        %1125 = vmatpush1.msra.mxu0 %v1103
        %1126 = vmatprep.subr.mxu0 0.0
        %1127 = vmatpush1.msra.mxu0 %v1104
        %1128 = vmatprep.subr.mxu0 0.0
        %1129 = vmatpush1.msra.mxu0 %v1105
        %1130 = vmatprep.subr.mxu0 0.0
        %1131 = vmatpush1.msra.mxu0 %v1106
        %1132 = vmatprep.subr.mxu0 0.0
        %1133 = vmatpush1.msra.mxu0 %v1107
        %1134 = vmatprep.subr.mxu0 0.0
        %1135 = vmatpush1.msra.mxu0 %v1108
        %1136 = vmatprep.subr.mxu0 0.0
        %1137 = vmatpush1.msra.mxu0 %v1109
        %1138 = vmatprep.subr.mxu0 0.0
        %1139 = vmatpush1.msra.mxu0 %v1110
        %1140 = vmatprep.subr.mxu0 0.0
        %1141 = vmatpush1.msra.mxu0 %v1111
        %1142 = vmatprep.subr.mxu0 0.0
        %1143 = vmatpush1.msra.mxu0 %v1112
        %1144 = vmatprep.subr.mxu0 0.0
        %1145 = vmatpush1.msra.mxu0 %v1113
        %1146 = vmatprep.subr.mxu0 0.0
        %1147 = vmatpush1.msra.mxu0 0.0
        %1148 = vmatprep.subr.mxu0 0.0
        %1149 = vmatpush1.msra.mxu0 0.0
        %1150 = vmatprep.subr.mxu0 0.0
        %1151 = vmatpush1.msra.mxu0 0.0
        %1152 = vmatprep.subr.mxu0 0.0
        %1153 = vmatpush1.msra.mxu0 0.0
        %1154 = vmatprep.subr.mxu0 0.0
        %1155 = vmatpush1.msra.mxu0 0.0
        %1156 = vmatprep.subr.mxu0 0.0
        %1157 = vmatpush1.msra.mxu0 0.0
        %1158 = vmatprep.subr.mxu0 0.0
        %1159 = vmatpush1.msra.mxu0 0.0
        %1160 = vmatprep.subr.mxu0 0.0
        %1161 = vmatpush1.msra.mxu0 0.0
        %1162 = vmatprep.subr.mxu0 0.0
        %1163 = vmatpush1.msra.mxu0 0.0
        %1164 = vmatprep.subr.mxu0 0.0
        %1165 = vmatpush1.msra.mxu0 0.0
        %1166 = vmatprep.subr.mxu0 0.0
        %1167 = vmatpush1.msra.mxu0 0.0
        %1168 = vmatprep.subr.mxu0 0.0
        %1169 = vmatpush1.msra.mxu0 0.0
        %1170 = vmatprep.subr.mxu0 0.0
        %1171 = vmatpush1.msra.mxu0 0.0
        %1172 = vmatprep.subr.mxu0 0.0
        %1173 = vmatpush1.msra.mxu0 0.0
        %1174 = vmatprep.subr.mxu0 0.0
        %1175 = vmatpush1.msra.mxu0 0.0
        %1176 = vmatprep.subr.mxu0 0.0
        %1177 = vmatpush1.msra.mxu0 0.0
        %1178 = vmatprep.mubr.f32.mxu0 0.0
        %1179 = vmatmul.mubr.f32.gmra.mrb[0].mxu0 %v1096
        %v1180 = vpop.f32.mrb[0].mxu0
        %v1181 = vadd.f32 0.0, %v1180
        %v1182 = vpop.f32.mrb[0].mxu0
        %1183 = vdwg.mxu0
        %v1184 = vadd.f32 %v1094, %v1181
        %v1185 = vmax.f32 %v1184, 0.0
        %1186 = vst [vmem:[#allocation5] sm:$0x3] %v1185
        %v1187 = vld [vmem:[%s8] sm:$0x1]
        %v1188 = vld [vmem:[#allocation5] ss:$2 sm:$0x1]
        %v1189 = vld [vmem:[%s7] sm:$0xff]
        %v1190 = vld [vmem:[%s7 + $0x8] sm:$0xff]
        %v1191 = vld [vmem:[%s7 + $0x10] sm:$0xff]
        %v1192 = vld [vmem:[%s7 + $0x18] sm:$0xff]
        %v1193 = vld [vmem:[%s7 + $0x20] sm:$0xff]
        %v1194 = vld [vmem:[%s7 + $0x28] sm:$0xff]
        %v1195 = vld [vmem:[%s7 + $0x30] sm:$0xff]
        %v1196 = vld [vmem:[%s7 + $0x38] sm:$0xff]
        %v1197 = vld [vmem:[%s7 + $0x40] sm:$0xff]
        %v1198 = vld [vmem:[%s7 + $0x48] sm:$0xff]
        %v1199 = vld [vmem:[%s7 + $0x50] sm:$0xff]
        %v1200 = vld [vmem:[%s7 + $0x58] sm:$0xff]
        %v1201 = vld [vmem:[%s7 + $0x60] sm:$0xff]
        %v1202 = vld [vmem:[%s7 + $0x68] sm:$0xff]
        %v1203 = vld [vmem:[%s7 + $0x70] sm:$0xff]
        %v1204 = vld [vmem:[%s7 + $0x78] sm:$0xff]
        %1205 = vmatprep.subr.mxu0 0.0
        %1206 = vmatpush1.msra.mxu0 %v1189
        %1207 = vmatprep.subr.mxu0 0.0
        %1208 = vmatpush1.msra.mxu0 %v1190
        %1209 = vmatprep.subr.mxu0 0.0
        %1210 = vmatpush1.msra.mxu0 %v1191
        %1211 = vmatprep.subr.mxu0 0.0
        %1212 = vmatpush1.msra.mxu0 %v1192
        %1213 = vmatprep.subr.mxu0 0.0
        %1214 = vmatpush1.msra.mxu0 %v1193
        %1215 = vmatprep.subr.mxu0 0.0
        %1216 = vmatpush1.msra.mxu0 %v1194
        %1217 = vmatprep.subr.mxu0 0.0
        %1218 = vmatpush1.msra.mxu0 %v1195
        %1219 = vmatprep.subr.mxu0 0.0
        %1220 = vmatpush1.msra.mxu0 %v1196
        %1221 = vmatprep.subr.mxu0 0.0
        %1222 = vmatpush1.msra.mxu0 %v1197
        %1223 = vmatprep.subr.mxu0 0.0
        %1224 = vmatpush1.msra.mxu0 %v1198
        %1225 = vmatprep.subr.mxu0 0.0
        %1226 = vmatpush1.msra.mxu0 %v1199
        %1227 = vmatprep.subr.mxu0 0.0
        %1228 = vmatpush1.msra.mxu0 %v1200
        %1229 = vmatprep.subr.mxu0 0.0
        %1230 = vmatpush1.msra.mxu0 %v1201
        %1231 = vmatprep.subr.mxu0 0.0
        %1232 = vmatpush1.msra.mxu0 %v1202
        %1233 = vmatprep.subr.mxu0 0.0
        %1234 = vmatpush1.msra.mxu0 %v1203
        %1235 = vmatprep.subr.mxu0 0.0
        %1236 = vmatpush1.msra.mxu0 %v1204
        %1237 = vmatprep.subr.mxu0 0.0
        %1238 = vmatpush1.msra.mxu0 0.0
        %1239 = vmatprep.subr.mxu0 0.0
        %1240 = vmatpush1.msra.mxu0 0.0
        %1241 = vmatprep.subr.mxu0 0.0
        %1242 = vmatpush1.msra.mxu0 0.0
        %1243 = vmatprep.subr.mxu0 0.0
        %1244 = vmatpush1.msra.mxu0 0.0
        %1245 = vmatprep.subr.mxu0 0.0
        %1246 = vmatpush1.msra.mxu0 0.0
        %1247 = vmatprep.subr.mxu0 0.0
        %1248 = vmatpush1.msra.mxu0 0.0
        %1249 = vmatprep.subr.mxu0 0.0
        %1250 = vmatpush1.msra.mxu0 0.0
        %1251 = vmatprep.subr.mxu0 0.0
        %1252 = vmatpush1.msra.mxu0 0.0
        %1253 = vmatprep.subr.mxu0 0.0
        %1254 = vmatpush1.msra.mxu0 0.0
        %1255 = vmatprep.subr.mxu0 0.0
        %1256 = vmatpush1.msra.mxu0 0.0
        %1257 = vmatprep.subr.mxu0 0.0
        %1258 = vmatpush1.msra.mxu0 0.0
        %1259 = vmatprep.subr.mxu0 0.0
        %1260 = vmatpush1.msra.mxu0 0.0
        %1261 = vmatprep.subr.mxu0 0.0
        %1262 = vmatpush1.msra.mxu0 0.0
        %1263 = vmatprep.subr.mxu0 0.0
        %1264 = vmatpush1.msra.mxu0 0.0
        %1265 = vmatprep.subr.mxu0 0.0
        %1266 = vmatpush1.msra.mxu0 0.0
        %1267 = vmatprep.subr.mxu0 0.0
        %1268 = vmatpush1.msra.mxu0 0.0
        %1269 = vmatprep.mubr.f32.mxu0 0.0
        %1270 = vmatmul.mubr.f32.gmra.mrb[0].mxu0 %v1188
        %v1271 = vpop.f32.mrb[0].mxu0
        %v1272 = vadd.f32 0.0, %v1271
        %v1273 = vpop.f32.mrb[0].mxu0
        %1274 = vdwg.mxu0
        %v1275 = vadd.f32 %v1187, %v1272
        %s1276 = scalar_lea.vmem [#allocation5], 1
        %v1277 = vld [vmem:[%s1276] ss:$2 sm:$0x1]
        %s1278 = scalar_lea.vmem %s7, 128
        %v1279 = vld [vmem:[%s1278] sm:$0xff]
        %v1280 = vld [vmem:[%s1278 + $0x8] sm:$0xff]
        %v1281 = vld [vmem:[%s1278 + $0x10] sm:$0xff]
        %v1282 = vld [vmem:[%s1278 + $0x18] sm:$0xff]
        %v1283 = vld [vmem:[%s1278 + $0x20] sm:$0xff]
        %v1284 = vld [vmem:[%s1278 + $0x28] sm:$0xff]
        %v1285 = vld [vmem:[%s1278 + $0x30] sm:$0xff]
        %v1286 = vld [vmem:[%s1278 + $0x38] sm:$0xff]
        %v1287 = vld [vmem:[%s1278 + $0x40] sm:$0xff]
        %v1288 = vld [vmem:[%s1278 + $0x48] sm:$0xff]
        %v1289 = vld [vmem:[%s1278 + $0x50] sm:$0xff]
        %v1290 = vld [vmem:[%s1278 + $0x58] sm:$0xff]
        %v1291 = vld [vmem:[%s1278 + $0x60] sm:$0xff]
        %v1292 = vld [vmem:[%s1278 + $0x68] sm:$0xff]
        %v1293 = vld [vmem:[%s1278 + $0x70] sm:$0xff]
        %v1294 = vld [vmem:[%s1278 + $0x78] sm:$0xff]
        %1295 = vmatprep.subr.mxu0 0.0
        %1296 = vmatpush1.msra.mxu0 %v1279
        %1297 = vmatprep.subr.mxu0 0.0
        %1298 = vmatpush1.msra.mxu0 %v1280
        %1299 = vmatprep.subr.mxu0 0.0
        %1300 = vmatpush1.msra.mxu0 %v1281
        %1301 = vmatprep.subr.mxu0 0.0
        %1302 = vmatpush1.msra.mxu0 %v1282
        %1303 = vmatprep.subr.mxu0 0.0
        %1304 = vmatpush1.msra.mxu0 %v1283
        %1305 = vmatprep.subr.mxu0 0.0
        %1306 = vmatpush1.msra.mxu0 %v1284
        %1307 = vmatprep.subr.mxu0 0.0
        %1308 = vmatpush1.msra.mxu0 %v1285
        %1309 = vmatprep.subr.mxu0 0.0
        %1310 = vmatpush1.msra.mxu0 %v1286
        %1311 = vmatprep.subr.mxu0 0.0
        %1312 = vmatpush1.msra.mxu0 %v1287
        %1313 = vmatprep.subr.mxu0 0.0
        %1314 = vmatpush1.msra.mxu0 %v1288
        %1315 = vmatprep.subr.mxu0 0.0
        %1316 = vmatpush1.msra.mxu0 %v1289
        %1317 = vmatprep.subr.mxu0 0.0
        %1318 = vmatpush1.msra.mxu0 %v1290
        %1319 = vmatprep.subr.mxu0 0.0
        %1320 = vmatpush1.msra.mxu0 %v1291
        %1321 = vmatprep.subr.mxu0 0.0
        %1322 = vmatpush1.msra.mxu0 %v1292
        %1323 = vmatprep.subr.mxu0 0.0
        %1324 = vmatpush1.msra.mxu0 %v1293
        %1325 = vmatprep.subr.mxu0 0.0
        %1326 = vmatpush1.msra.mxu0 %v1294
        %1327 = vmatprep.subr.mxu0 0.0
        %1328 = vmatpush1.msra.mxu0 0.0
        %1329 = vmatprep.subr.mxu0 0.0
        %1330 = vmatpush1.msra.mxu0 0.0
        %1331 = vmatprep.subr.mxu0 0.0
        %1332 = vmatpush1.msra.mxu0 0.0
        %1333 = vmatprep.subr.mxu0 0.0
        %1334 = vmatpush1.msra.mxu0 0.0
        %1335 = vmatprep.subr.mxu0 0.0
        %1336 = vmatpush1.msra.mxu0 0.0
        %1337 = vmatprep.subr.mxu0 0.0
        %1338 = vmatpush1.msra.mxu0 0.0
        %1339 = vmatprep.subr.mxu0 0.0
        %1340 = vmatpush1.msra.mxu0 0.0
        %1341 = vmatprep.subr.mxu0 0.0
        %1342 = vmatpush1.msra.mxu0 0.0
        %1343 = vmatprep.subr.mxu0 0.0
        %1344 = vmatpush1.msra.mxu0 0.0
        %1345 = vmatprep.subr.mxu0 0.0
        %1346 = vmatpush1.msra.mxu0 0.0
        %1347 = vmatprep.subr.mxu0 0.0
        %1348 = vmatpush1.msra.mxu0 0.0
        %1349 = vmatprep.subr.mxu0 0.0
        %1350 = vmatpush1.msra.mxu0 0.0
        %1351 = vmatprep.subr.mxu0 0.0
        %1352 = vmatpush1.msra.mxu0 0.0
        %1353 = vmatprep.subr.mxu0 0.0
        %1354 = vmatpush1.msra.mxu0 0.0
        %1355 = vmatprep.subr.mxu0 0.0
        %1356 = vmatpush1.msra.mxu0 0.0
        %1357 = vmatprep.subr.mxu0 0.0
        %1358 = vmatpush1.msra.mxu0 0.0
        %1359 = vmatprep.mubr.f32.mxu0 0.0
        %1360 = vmatmul.mubr.f32.gmra.mrb[0].mxu0 %v1277
        %v1361 = vpop.f32.mrb[0].mxu0
        %v1362 = vadd.f32 0.0, %v1361
        %v1363 = vpop.f32.mrb[0].mxu0
        %1364 = vdwg.mxu0
        %v1365 = vadd.f32 %v1275, %v1362
        %1366 = vst [vmem:[%s358] sm:$0x1] %v1365
        %p1367 = scmp.lt.s32.totalorder %s22, 1
        %s1368 = scalar_select %p1367, %s22, 1
        %s1369 = scalar_lea.vmem %s9, %s1368
        // Predicated region
        $region65: #{vencoder_forward.1} parent=55 // pred_check
          %p1370 = pneg %p234
        $region66: #{vencoder_forward.1} parent=55 // pred_check_branch
          %1372 = sbr.rel (%p1370) target = $region68
        $region67: #{vencoder_forward.1} parent=55 // pred_region
          _
        $region68: #{vencoder_forward.1} parent=55 // pred_fallthru
          _
      $region56: #{vencoder_forward.1} parent=5 // pred_fallthru
        _
      %p1373 = scmp.le.s32.totalorder 2, %s17
      // Predicated region
      $region69: #{vencoder_forward.1} parent=5 // pred_check
        %p1374 = pneg %p1373
      $region70: #{vencoder_forward.1} parent=5 // pred_check_branch
        %1376 = sbr.rel (%p1374) target = $region72
      $region71: #{vencoder_forward.1} parent=5 // pred_region
        %s1377 = ssub.s32 %s17, 2
        // Predicated region
        $region73: #{vencoder_forward.1} parent=71 // pred_check
          %p1378 = pneg %p240
        $region74: #{vencoder_forward.1} parent=71 // pred_check_branch
          %1380 = sbr.rel (%p1378) target = $region76
        $region75: #{vencoder_forward.1} parent=71 // pred_region
          %p1381 = scmp.lt.s32.totalorder %s23, 1
          %s1382 = scalar_select %p1381, %s23, 1
          %s1383 = scalar_lea.vmem %s9, %s1382
        $region76: #{vencoder_forward.1} parent=71 // pred_fallthru
          _
      $region72: #{vencoder_forward.1} parent=5 // pred_fallthru
        _
    $region6: #{vencoder_forward.1} parent=1 // loop_footer
      %s21 = sadd.s32 1, %s17
    $region7: #{vencoder_forward.1} parent=1 // loop_footer_branch
      %16 = sbr.rel target = $region3
    $region8: #{vencoder_forward.1} parent=1 // loop_exit
      _
    %1384 = vsyncpa [#allocation8], 1
    %s1385 = scalar_lea.sflag [#allocation8], 1
    %1386 = vsyncpa %s1385, 1
    %1387 = vsyncpa [#allocation10], 1

</llo_original>
